<compile_context>
chip_gen: v7x
topology: tpu7x:2x2x1
jax: 0.10.0
libtpu: 0.0.40
codegen_flags: <defaults>
</compile_context>

<pallas_src>
import functools

import jax
import jax.numpy as jnp
from jax.experimental import pallas as pl
from jax.experimental.pallas import tpu as pltpu

# ---------------- configuration (matches the Table-Encoder usage of MLP) ----------------
BATCH = 512                                    # rows per call; gridded in BLOCK_M chunks
INPUT_SIZE = 512                               # dim * nfeats in the encoder
L = INPUT_SIZE // 8
MLP_DIMS = (INPUT_SIZE, L * 4, L * 2, 1)       # (512, 256, 128, 1), act=None
BLOCK_M = 256                                  # row tile; multiple of 256 for v6e/v7x MXU


# ---------------- Pallas kernel ----------------
def _make_mlp_kernel(n_layers, rowvec_last, act=None):
    """Fused MLP: all layers unrolled statically; intermediate activations stay in VMEM."""
    def kernel(*refs):
        x_ref = refs[0]
        w_refs = refs[1:1 + n_layers]
        b_refs = refs[1 + n_layers:1 + 2 * n_layers]
        o_ref = refs[-1]

        h = x_ref[...]                                           # (BLOCK_M, dims[0]) f32
        for i in range(n_layers):                                # static unroll
            hb = h.astype(w_refs[i].dtype)                       # bf16 matmul operand
            if rowvec_last and i == n_layers - 1:
                # out_features == 1 head: weight stored as a (1, K) row vector.
                # VPU multiply + XLU lane reduction; products exact in f32; no MXU pass.
                w = w_refs[i][...].astype(jnp.float32)
                h = jnp.sum(hb.astype(jnp.float32) * w, axis=-1,
                            keepdims=True) + b_refs[i][...]
            else:
                h = jnp.dot(hb, w_refs[i][...],
                            preferred_element_type=jnp.float32) + b_refs[i][...]
            if act is not None:
                # PyTorch module appends `act` after every Linear (its is_last check
                # never fires); act is None in this configuration.
                h = act(h)
        o_ref[...] = h
    return kernel


# ---------------- pallas_call wrapper ----------------
def mlp_forward(x, weights, biases, rowvec_last, act=None, block_m=BLOCK_M):
    """x: (B, dims[0]) f32.
    weights[i]: bf16, (dims[i], dims[i+1]); the last one is (1, dims[-2]) if rowvec_last.
    biases[i]: f32, (1, dims[i+1])."""
    n_layers = len(weights)
    batch = x.shape[0]
    assert batch % block_m == 0, (batch, block_m)
    out_dim = 1 if rowvec_last else weights[-1].shape[1]

    # Advisory cost estimate so the XLA scheduler can overlap this DMA-bound call.
    flops = 0
    for i, w in enumerate(weights):
        if rowvec_last and i == n_layers - 1:
            din, dout = w.shape[1], 1
        else:
            din, dout = w.shape
        flops += 2 * batch * din * dout
    bytes_accessed = (x.size * x.dtype.itemsize
                      + sum(w.size * w.dtype.itemsize for w in weights)
                      + sum(b.size * b.dtype.itemsize for b in biases)
                      + batch * out_dim * 4)
    cost = pl.CostEstimate(flops=flops, transcendentals=0, bytes_accessed=bytes_accessed)

    return pl.pallas_call(
        _make_mlp_kernel(n_layers, rowvec_last, act),
        out_shape=jax.ShapeDtypeStruct((batch, out_dim), jnp.float32),
        grid=(batch // block_m,),
        in_specs=(
            [pl.BlockSpec((block_m, x.shape[1]), lambda i: (i, 0))]           # row tiles
            + [pl.BlockSpec(w.shape, lambda i: (0, 0)) for w in weights]      # resident
            + [pl.BlockSpec(b.shape, lambda i: (0, 0)) for b in biases]       # resident
        ),
        out_specs=pl.BlockSpec((block_m, out_dim), lambda i: (i, 0)),
        compiler_params=pltpu.CompilerParams(
            dimension_semantics=("parallel",),        # v7x: both TensorCores split rows
            vmem_limit_bytes=32 * 1024 * 1024),
        cost_estimate=cost,
    )(x, *weights, *biases)


# ---------------- pure-JAX references ----------------
def ref_forward_bf16(x, weights, biases, rowvec_last, act=None):
    """Reproduces the kernel's operand quantization (bf16 matmul operands, f32 accum)."""
    h = x
    n = len(weights)
    for i, (w, b) in enumerate(zip(weights, biases)):
        hb = h.astype(jnp.bfloat16).astype(jnp.float32)
        wf = (w.T if (rowvec_last and i == n - 1) else w).astype(jnp.float32)
        h = jnp.dot(hb, wf, precision=jax.lax.Precision.HIGHEST) + b
        if act is not None:
            h = act(h)
    return h


def ref_forward_f32(x, weights_f32, biases, act=None):
    """Plain f32 reference matching the PyTorch module's math."""
    h = x
    for w, b in zip(weights_f32, biases):
        h = jnp.dot(h, w, precision=jax.lax.Precision.HIGHEST) + b
        if act is not None:
            h = act(h)
    return h


# ---------------- deterministic parameter init (nn.Linear-style uniform) ----------------
def init_params(key, dims):
    """Returns kernel-ready params: bf16 weights (last layer as a (1,K) row vector when
    out_features==1), f32 biases, plus the original f32 weights for the loose reference.
    The bf16 cast / transpose is hoisted here — done once, never in the hot path."""
    ks = jax.random.split(key, 2 * (len(dims) - 1))
    weights_f32, biases = [], []
    for i, (din, dout) in enumerate(zip(dims[:-1], dims[1:])):
        bound = float(din) ** -0.5
        weights_f32.append(
            jax.random.uniform(ks[2 * i], (din, dout), jnp.float32, -bound, bound))
        biases.append(
            jax.random.uniform(ks[2 * i + 1], (1, dout), jnp.float32, -bound, bound))

    rowvec_last = dims[-1] == 1
    weights = []
    for i, w in enumerate(weights_f32):
        wb = w.astype(jnp.bfloat16)
        if rowvec_last and i == len(weights_f32) - 1:
            wb = wb.T                                            # (1, K) row vector
        weights.append(wb)
    return weights, biases, weights_f32, rowvec_last


# ---------------- main ----------------
if __name__ == "__main__":
    key = jax.random.PRNGKey(0)
    kx, kp = jax.random.split(key)

    x = jax.random.normal(kx, (BATCH, MLP_DIMS[0]), jnp.float32)
    weights, biases, weights_f32, rowvec_last = init_params(kp, MLP_DIMS)

    fwd = jax.jit(functools.partial(mlp_forward, rowvec_last=rowvec_last, act=None))
    out = jax.block_until_ready(fwd(x, weights, biases))

    ref_b = ref_forward_bf16(x, weights, biases, rowvec_last, act=None)   # same quantization
    ref_f = ref_forward_f32(x, weights_f32, biases, act=None)             # module semantics

    assert out.shape == (BATCH, MLP_DIMS[-1]), out.shape
    assert bool(jnp.all(jnp.isfinite(out)))
    assert bool(jnp.allclose(out, ref_b, atol=5e-3, rtol=5e-3)), "mismatch vs bf16 reference"
    assert bool(jnp.allclose(out, ref_f, atol=5e-2, rtol=5e-2)), "mismatch vs f32 reference"
    print("KERNEL_OK")
</pallas_src>

<mosaic_0001>
module attributes {stable_mosaic.version = 11 : i64} {
  func.func @kernel(%arg0: i32, %arg1: memref<256x512xf32, #tpu.memory_space<vmem>>, %arg2: memref<512x256xbf16, #tpu.memory_space<vmem>>, %arg3: memref<256x128xbf16, #tpu.memory_space<vmem>>, %arg4: memref<1x128xbf16, #tpu.memory_space<vmem>>, %arg5: memref<1x256xf32, #tpu.memory_space<vmem>>, %arg6: memref<1x128xf32, #tpu.memory_space<vmem>>, %arg7: memref<1x1xf32, #tpu.memory_space<vmem>>, %arg8: memref<256x1xf32, #tpu.memory_space<vmem>>) attributes {dimension_semantics = [#tpu.dimension_semantics<parallel>], iteration_bounds = array<i64: 2>, scalar_prefetch = 0 : i64, scratch_operands = 0 : i64, tpu.core_type = #tpu.core_type<tc>, window_params = [{transform_indices = @transform_0, window_bounds = array<i64: 256, 512>}, {pipeline_mode = #tpu.pipeline_mode<synchronous>, transform_indices = @transform_1, window_bounds = array<i64: 512, 256>}, {pipeline_mode = #tpu.pipeline_mode<synchronous>, transform_indices = @transform_2, window_bounds = array<i64: 256, 128>}, {pipeline_mode = #tpu.pipeline_mode<synchronous>, transform_indices = @transform_3, window_bounds = array<i64: 1, 128>}, {pipeline_mode = #tpu.pipeline_mode<synchronous>, transform_indices = @transform_4, window_bounds = array<i64: 1, 256>}, {pipeline_mode = #tpu.pipeline_mode<synchronous>, transform_indices = @transform_5, window_bounds = array<i64: 1, 128>}, {pipeline_mode = #tpu.pipeline_mode<synchronous>, transform_indices = @transform_6, window_bounds = array<i64: 1, 1>}, {transform_indices = @transform_7, window_bounds = array<i64: 256, 1>}]} {
    %c0 = arith.constant 0 : index
    %c0_0 = arith.constant 0 : index
    %0 = vector.load %arg1[%c0, %c0_0] : memref<256x512xf32, #tpu.memory_space<vmem>>, vector<256x512xf32>
    %1 = arith.truncf %0 : vector<256x512xf32> to vector<256x512xbf16>
    %c0_1 = arith.constant 0 : index
    %c0_2 = arith.constant 0 : index
    %2 = vector.load %arg2[%c0_1, %c0_2] : memref<512x256xbf16, #tpu.memory_space<vmem>>, vector<512x256xbf16>
    %cst = arith.constant dense<0.000000e+00> : vector<256x256xf32>
    %3 = tpu.matmul %1, %2, %cst {dimension_numbers = #tpu.dot_dimension_numbers<[1], [0], [0], [1], [0, 0, 1, 1], [], []>} : vector<256x512xbf16>, vector<512x256xbf16>, vector<256x256xf32> -> vector<256x256xf32>
    %c0_3 = arith.constant 0 : index
    %c0_4 = arith.constant 0 : index
    %4 = vector.load %arg5[%c0_3, %c0_4] : memref<1x256xf32, #tpu.memory_space<vmem>>, vector<1x256xf32>
    %5 = vector.broadcast %4 : vector<1x256xf32> to vector<256x256xf32>
    %6 = arith.addf %3, %5 : vector<256x256xf32>
    %7 = arith.truncf %6 : vector<256x256xf32> to vector<256x256xbf16>
    %c0_5 = arith.constant 0 : index
    %c0_6 = arith.constant 0 : index
    %8 = vector.load %arg3[%c0_5, %c0_6] : memref<256x128xbf16, #tpu.memory_space<vmem>>, vector<256x128xbf16>
    %cst_7 = arith.constant dense<0.000000e+00> : vector<256x128xf32>
    %9 = tpu.matmul %7, %8, %cst_7 {dimension_numbers = #tpu.dot_dimension_numbers<[1], [0], [0], [1], [0, 0, 1, 1], [], []>} : vector<256x256xbf16>, vector<256x128xbf16>, vector<256x128xf32> -> vector<256x128xf32>
    %c0_8 = arith.constant 0 : index
    %c0_9 = arith.constant 0 : index
    %10 = vector.load %arg6[%c0_8, %c0_9] : memref<1x128xf32, #tpu.memory_space<vmem>>, vector<1x128xf32>
    %11 = vector.broadcast %10 : vector<1x128xf32> to vector<256x128xf32>
    %12 = arith.addf %9, %11 : vector<256x128xf32>
    %13 = arith.truncf %12 : vector<256x128xf32> to vector<256x128xbf16>
    %c0_10 = arith.constant 0 : index
    %c0_11 = arith.constant 0 : index
    %14 = vector.load %arg4[%c0_10, %c0_11] : memref<1x128xbf16, #tpu.memory_space<vmem>>, vector<1x128xbf16>
    %15 = arith.extf %14 : vector<1x128xbf16> to vector<1x128xf32>
    %16 = arith.extf %13 : vector<256x128xbf16> to vector<256x128xf32>
    %17 = vector.broadcast %15 : vector<1x128xf32> to vector<256x128xf32>
    %18 = arith.mulf %16, %17 : vector<256x128xf32>
    %cst_12 = arith.constant dense<0.000000e+00> : vector<256xf32>
    %19 = vector.multi_reduction <add>, %18, %cst_12 [1] : vector<256x128xf32> to vector<256xf32>
    %20 = vector.shape_cast %19 : vector<256xf32> to vector<256x1xf32>
    %c0_13 = arith.constant 0 : index
    %c0_14 = arith.constant 0 : index
    %21 = vector.load %arg7[%c0_13, %c0_14] : memref<1x1xf32, #tpu.memory_space<vmem>>, vector<1x1xf32>
    %22 = vector.broadcast %21 : vector<1x1xf32> to vector<256x1xf32>
    %23 = arith.addf %20, %22 : vector<256x1xf32>
    %c0_15 = arith.constant 0 : index
    %c0_16 = arith.constant 0 : index
    %24 = vector.load %arg8[%c0_15, %c0_16] : memref<256x1xf32, #tpu.memory_space<vmem>>, vector<256x1xf32>
    tpu.vector_store %arg8[%c0_15, %c0_16], %23 {strides = array<i32>} : memref<256x1xf32, #tpu.memory_space<vmem>>, vector<256x1xf32>,
    return
  }
  func.func @transform_0(%arg0: i32) -> (i32, i32) {
    %c0_i32 = arith.constant 0 : i32
    %c0_i32_0 = arith.constant 0 : i32
    return %arg0, %c0_i32 : i32, i32
  }
  func.func @transform_1(%arg0: i32) -> (i32, i32) {
    %c0_i32 = arith.constant 0 : i32
    %c0_i32_0 = arith.constant 0 : i32
    %c0_i32_1 = arith.constant 0 : i32
    return %c0_i32, %c0_i32_0 : i32, i32
  }
  func.func @transform_2(%arg0: i32) -> (i32, i32) {
    %c0_i32 = arith.constant 0 : i32
    %c0_i32_0 = arith.constant 0 : i32
    %c0_i32_1 = arith.constant 0 : i32
    return %c0_i32, %c0_i32_0 : i32, i32
  }
  func.func @transform_3(%arg0: i32) -> (i32, i32) {
    %c0_i32 = arith.constant 0 : i32
    %c0_i32_0 = arith.constant 0 : i32
    %c0_i32_1 = arith.constant 0 : i32
    return %c0_i32, %c0_i32_0 : i32, i32
  }
  func.func @transform_4(%arg0: i32) -> (i32, i32) {
    %c0_i32 = arith.constant 0 : i32
    %c0_i32_0 = arith.constant 0 : i32
    %c0_i32_1 = arith.constant 0 : i32
    return %c0_i32, %c0_i32_0 : i32, i32
  }
  func.func @transform_5(%arg0: i32) -> (i32, i32) {
    %c0_i32 = arith.constant 0 : i32
    %c0_i32_0 = arith.constant 0 : i32
    %c0_i32_1 = arith.constant 0 : i32
    return %c0_i32, %c0_i32_0 : i32, i32
  }
  func.func @transform_6(%arg0: i32) -> (i32, i32) {
    %c0_i32 = arith.constant 0 : i32
    %c0_i32_0 = arith.constant 0 : i32
    %c0_i32_1 = arith.constant 0 : i32
    return %c0_i32, %c0_i32_0 : i32, i32
  }
  func.func @transform_7(%arg0: i32) -> (i32, i32) {
    %c0_i32 = arith.constant 0 : i32
    %c0_i32_0 = arith.constant 0 : i32
    return %arg0, %c0_i32 : i32, i32
  }
}

</mosaic_0001>

<llo_original>
// kernel: mlp_forward.1
$region0: #{mlp_forward.1}
  #allocation0 [shape = 'u32[]', space=smem, size = 0x4, offset = 0x4, fixed_abs, tag = 'smem constant byte address 0x4 - core index']
  #allocation1 [shape = 'u32[144,128]{1,0:T(1,128)}', space=vmem, size = 0x12000, scoped, tag = 'internal scratch']
  #allocation2 [shape = 'f32[1,1]{1,0:T(1,128)S(1)}', space=vmem, size = 0x200, scoped, tag = 'scoped memory for mlp_forward.1']
  %s0 = inlined_call_operand.hbm [shape: f32[512,512], index: 0, kind: input, shape index: {}]
  %s1 = inlined_call_operand.hbm [shape: bf16[512,256], index: 1, kind: input, shape index: {}]
  %s2 = inlined_call_operand.hbm [shape: bf16[256,128], index: 2, kind: input, shape index: {}]
  %s3 = inlined_call_operand.vmem [shape: bf16[1,128], index: 3, kind: input, shape index: {}]
  %s4 = inlined_call_operand.vmem [shape: f32[1,256], index: 4, kind: input, shape index: {}]
  %s5 = inlined_call_operand.vmem [shape: f32[1,128], index: 5, kind: input, shape index: {}]
  %s6 = inlined_call_operand.<no memory space> [shape: f32[1,1], index: 6, kind: input, shape index: {}]
  %s7 = inlined_call_operand.vmem [shape: f32[512,1], index: 7, kind: output, shape index: {}]
  %s8 = sld [smem:[#allocation0]]
  $region73: #{mlp_forward.1} parent=0
    _
  %s10 = ssub.s32 1, %s8
  %s11 = scalar_select 0, %s10, %s8
  %v12 = vstv %s6
  %13 = vst [vmem:[#allocation2] sm:$0x1] %v12
  $region1: #{mlp_forward.1} parent=0
    #allocation3 [shape = 'u8[1048576]{0}', space=vmem, size = 0x100000, scoped, tag = 'input window, operand 0']
    #allocation4 [shape = 's32[2]{0}', space=sflag, size = 0x8, scoped, tag = 'scoped memory for mlp_forward.1']
    #allocation5 [shape = 'u8[262144]{0}', space=vmem, size = 0x40000, scoped, tag = 'input window, operand 1, single buffered']
    #allocation6 [shape = 's32[1]{0}', space=sflag, size = 0x4, scoped, tag = 'scoped memory for mlp_forward.1']
    #allocation7 [shape = 'u8[65536]{0}', space=vmem, size = 0x10000, scoped, tag = 'input window, operand 2, single buffered']
    %14 = vsyncpa [#allocation4], 0
    %s15 = scalar_lea.sflag [#allocation4], 1
    %16 = vsyncpa %s15, 0
    %17 = vsyncpa [#allocation6], 0
    loop: start=0, step=1, limit=4
    $region2: #{mlp_forward.1} parent=1 // loop_pre_header
      _
    $region3: #{mlp_forward.1} parent=1 // loop_header
      %s19 = sphi 0, %s23
      %p20 = scmp.ge.s32.totalorder %s19, 4
      %s29 = sphi 0, %s31
      %s32 = sphi 0, %s29
      %s33 = sphi 0, %s32
      %s49 = sphi 0, %s33
      %s53 = sphi 0, %s53
      %s55 = sphi 0, %s53
      %s56 = sphi 0, %s55
      %s70 = sphi 0, %s56
      %s74 = sphi 0, %s74
      %s76 = sphi 0, %s74
      %s77 = sphi 0, %s76
      %s91 = sphi 0, %s77
      %s95 = sphi 0, %s95
      %s97 = sphi 0, %s95
      %s98 = sphi 0, %s97
      %s112 = sphi 0, %s98
      %s116 = sphi 0, %s116
      %s118 = sphi 0, %s116
      %s119 = sphi 0, %s118
      %s133 = sphi 0, %s119
      %s137 = sphi 0, %s137
      %s139 = sphi 0, %s137
      %s140 = sphi 0, %s139
      %s154 = sphi 0, %s140
      %s158 = sphi 0, %s158
      %s160 = sphi 0, %s158
      %s161 = sphi 0, %s160
      %s175 = sphi 0, %s161
      %s181 = sphi 0, %s183
      %s184 = sphi 0, %s181
      %s185 = sphi 0, %s184
      %s201 = sphi 0, %s185
    $region4: #{mlp_forward.1} parent=1 // loop_header_branch
      %22 = sbr.rel (%p20) target = $region8
    $region5: #{mlp_forward.1} parent=1 // loop_body
      %s24 = ssub.s32 %s19, 1
      %s25 = ssub.s32 %s19, 2
      %s26 = sadd.s32 %s19, 1
      %s27 = ssub.s32 %s19, %s26
      %p28 = scmp.eq.s32.totalorder %s27, 0
      %s30 = sadd.s32 %s29, 1
      %s31 = scalar_select %p28, %s29, %s30
      %p34 = pneg %p28
      %p35 = scmp.eq.s32.totalorder %s19, 1
      %p36 = por %p34, %p35
      %p37 = scmp.ne.s32.totalorder %s29, %s32
      %p38 = scmp.eq.s32.totalorder %s19, 0
      %p39 = por %p37, %p38
      %p40 = scmp.ne.s32.totalorder %s29, %s32
      %p41 = scmp.eq.s32.totalorder %s24, 1
      %p42 = por %p40, %p41
      %p43 = scmp.ne.s32.totalorder %s32, %s33
      %p44 = scmp.eq.s32.totalorder %s24, 0
      %p45 = por %p43, %p44
      %p46 = scmp.ne.s32.totalorder %s32, %s33
      %p47 = scmp.eq.s32.totalorder %s25, 1
      %p48 = por %p46, %p47
      %p50 = scmp.ne.s32.totalorder %s33, %s49
      %p51 = scmp.eq.s32.totalorder %s25, 0
      %p52 = por %p50, %p51
      %s54 = sadd.s32 %s53, 1
      %p57 = scmp.eq.s32.totalorder %s19, 1
      %p58 = scmp.ne.s32.totalorder %s53, %s55
      %p59 = scmp.eq.s32.totalorder %s19, 0
      %p60 = por %p58, %p59
      %p61 = scmp.ne.s32.totalorder %s53, %s55
      %p62 = scmp.eq.s32.totalorder %s24, 1
      %p63 = por %p61, %p62
      %p64 = scmp.ne.s32.totalorder %s55, %s56
      %p65 = scmp.eq.s32.totalorder %s24, 0
      %p66 = por %p64, %p65
      %p67 = scmp.ne.s32.totalorder %s55, %s56
      %p68 = scmp.eq.s32.totalorder %s25, 1
      %p69 = por %p67, %p68
      %p71 = scmp.ne.s32.totalorder %s56, %s70
      %p72 = scmp.eq.s32.totalorder %s25, 0
      %p73 = por %p71, %p72
      %s75 = sadd.s32 %s74, 1
      %p78 = scmp.eq.s32.totalorder %s19, 1
      %p79 = scmp.ne.s32.totalorder %s74, %s76
      %p80 = scmp.eq.s32.totalorder %s19, 0
      %p81 = por %p79, %p80
      %p82 = scmp.ne.s32.totalorder %s74, %s76
      %p83 = scmp.eq.s32.totalorder %s24, 1
      %p84 = por %p82, %p83
      %p85 = scmp.ne.s32.totalorder %s76, %s77
      %p86 = scmp.eq.s32.totalorder %s24, 0
      %p87 = por %p85, %p86
      %p88 = scmp.ne.s32.totalorder %s76, %s77
      %p89 = scmp.eq.s32.totalorder %s25, 1
      %p90 = por %p88, %p89
      %p92 = scmp.ne.s32.totalorder %s77, %s91
      %p93 = scmp.eq.s32.totalorder %s25, 0
      %p94 = por %p92, %p93
      %s96 = sadd.s32 %s95, 1
      %p99 = scmp.eq.s32.totalorder %s19, 1
      %p100 = scmp.ne.s32.totalorder %s95, %s97
      %p101 = scmp.eq.s32.totalorder %s19, 0
      %p102 = por %p100, %p101
      %p103 = scmp.ne.s32.totalorder %s95, %s97
      %p104 = scmp.eq.s32.totalorder %s24, 1
      %p105 = por %p103, %p104
      %p106 = scmp.ne.s32.totalorder %s97, %s98
      %p107 = scmp.eq.s32.totalorder %s24, 0
      %p108 = por %p106, %p107
      %p109 = scmp.ne.s32.totalorder %s97, %s98
      %p110 = scmp.eq.s32.totalorder %s25, 1
      %p111 = por %p109, %p110
      %p113 = scmp.ne.s32.totalorder %s98, %s112
      %p114 = scmp.eq.s32.totalorder %s25, 0
      %p115 = por %p113, %p114
      %s117 = sadd.s32 %s116, 1
      %p120 = scmp.eq.s32.totalorder %s19, 1
      %p121 = scmp.ne.s32.totalorder %s116, %s118
      %p122 = scmp.eq.s32.totalorder %s19, 0
      %p123 = por %p121, %p122
      %p124 = scmp.ne.s32.totalorder %s116, %s118
      %p125 = scmp.eq.s32.totalorder %s24, 1
      %p126 = por %p124, %p125
      %p127 = scmp.ne.s32.totalorder %s118, %s119
      %p128 = scmp.eq.s32.totalorder %s24, 0
      %p129 = por %p127, %p128
      %p130 = scmp.ne.s32.totalorder %s118, %s119
      %p131 = scmp.eq.s32.totalorder %s25, 1
      %p132 = por %p130, %p131
      %p134 = scmp.ne.s32.totalorder %s119, %s133
      %p135 = scmp.eq.s32.totalorder %s25, 0
      %p136 = por %p134, %p135
      %s138 = sadd.s32 %s137, 1
      %p141 = scmp.eq.s32.totalorder %s19, 1
      %p142 = scmp.ne.s32.totalorder %s137, %s139
      %p143 = scmp.eq.s32.totalorder %s19, 0
      %p144 = por %p142, %p143
      %p145 = scmp.ne.s32.totalorder %s137, %s139
      %p146 = scmp.eq.s32.totalorder %s24, 1
      %p147 = por %p145, %p146
      %p148 = scmp.ne.s32.totalorder %s139, %s140
      %p149 = scmp.eq.s32.totalorder %s24, 0
      %p150 = por %p148, %p149
      %p151 = scmp.ne.s32.totalorder %s139, %s140
      %p152 = scmp.eq.s32.totalorder %s25, 1
      %p153 = por %p151, %p152
      %p155 = scmp.ne.s32.totalorder %s140, %s154
      %p156 = scmp.eq.s32.totalorder %s25, 0
      %p157 = por %p155, %p156
      %s159 = sadd.s32 %s158, 1
      %p162 = scmp.eq.s32.totalorder %s19, 1
      %p163 = scmp.ne.s32.totalorder %s158, %s160
      %p164 = scmp.eq.s32.totalorder %s19, 0
      %p165 = por %p163, %p164
      %p166 = scmp.ne.s32.totalorder %s158, %s160
      %p167 = scmp.eq.s32.totalorder %s24, 1
      %p168 = por %p166, %p167
      %p169 = scmp.ne.s32.totalorder %s160, %s161
      %p170 = scmp.eq.s32.totalorder %s24, 0
      %p171 = por %p169, %p170
      %p172 = scmp.ne.s32.totalorder %s160, %s161
      %p173 = scmp.eq.s32.totalorder %s25, 1
      %p174 = por %p172, %p173
      %p176 = scmp.ne.s32.totalorder %s161, %s175
      %p177 = scmp.eq.s32.totalorder %s25, 0
      %p178 = por %p176, %p177
      %s179 = ssub.s32 %s19, %s26
      %p180 = scmp.eq.s32.totalorder %s179, 0
      %s182 = sadd.s32 %s181, 1
      %s183 = scalar_select %p180, %s181, %s182
      %p186 = pneg %p180
      %p187 = scmp.eq.s32.totalorder %s19, 1
      %p188 = por %p186, %p187
      %p189 = scmp.ne.s32.totalorder %s181, %s184
      %p190 = scmp.eq.s32.totalorder %s19, 0
      %p191 = por %p189, %p190
      %p192 = scmp.ne.s32.totalorder %s181, %s184
      %p193 = scmp.eq.s32.totalorder %s24, 1
      %p194 = por %p192, %p193
      %p195 = scmp.ne.s32.totalorder %s184, %s185
      %p196 = scmp.eq.s32.totalorder %s24, 0
      %p197 = por %p195, %p196
      %p198 = scmp.ne.s32.totalorder %s184, %s185
      %p199 = scmp.eq.s32.totalorder %s25, 1
      %p200 = por %p198, %p199
      %p202 = scmp.ne.s32.totalorder %s185, %s201
      %p203 = scmp.eq.s32.totalorder %s25, 0
      %p204 = por %p202, %p203
      %p205 = scmp.le.s32.totalorder 1, %s19
      %p206 = scmp.lt.s32.totalorder %s19, 3
      %p207 = pnand %p205, %p206
      %p208 = pneg %p207
      // Predicated region
      $region9: #{mlp_forward.1} parent=5 // pred_check
        _
      $region10: #{mlp_forward.1} parent=5 // pred_check_branch
        %210 = sbr.rel (%p207) target = $region12
      $region11: #{mlp_forward.1} parent=5 // pred_region
        %s211 = ssub.s32 %s19, 1
        // Predicated region
        $region13: #{mlp_forward.1} parent=11 // pred_check
          %p212 = pneg %p66
        $region14: #{mlp_forward.1} parent=11 // pred_check_branch
          %214 = sbr.rel (%p212) target = $region16
        $region15: #{mlp_forward.1} parent=11 // pred_region
          %s216 = ssub.s32 8192, 8192
          %217 = vsyncadd [#allocation6], %s216
          %s218 = sshll.u32 [#allocation5], 4
          %s219 = int_to_ptr.vmem [resolvable:$true] %s218
          %224 = dma.hbm_to_vmem [thread:$0]  %s1, 8192, %s219, [#allocation6], 128, 128, 8
        $region16: #{mlp_forward.1} parent=11 // pred_fallthru
          _
        // Predicated region
        $region17: #{mlp_forward.1} parent=11 // pred_check
          %p225 = pneg %p87
        $region18: #{mlp_forward.1} parent=11 // pred_check_branch
          %227 = sbr.rel (%p225) target = $region20
        $region19: #{mlp_forward.1} parent=11 // pred_region
          %s229 = ssub.s32 2048, 2048
          %230 = vsyncadd [#allocation6], %s229
          %s231 = sshll.u32 [#allocation7], 4
          %s232 = int_to_ptr.vmem [resolvable:$true] %s231
          %237 = dma.hbm_to_vmem [thread:$0]  %s2, 2048, %s232, [#allocation6], 64, 64, 4
        $region20: #{mlp_forward.1} parent=11 // pred_fallthru
          _
        // Predicated region
        $region21: #{mlp_forward.1} parent=11 // pred_check
          %p238 = pneg %p108
        $region22: #{mlp_forward.1} parent=11 // pred_check_branch
          %240 = sbr.rel (%p238) target = $region24
        $region23: #{mlp_forward.1} parent=11 // pred_region
          _
        $region24: #{mlp_forward.1} parent=11 // pred_fallthru
          _
        // Predicated region
        $region25: #{mlp_forward.1} parent=11 // pred_check
          %p241 = pneg %p129
        $region26: #{mlp_forward.1} parent=11 // pred_check_branch
          %243 = sbr.rel (%p241) target = $region28
        $region27: #{mlp_forward.1} parent=11 // pred_region
          _
        $region28: #{mlp_forward.1} parent=11 // pred_fallthru
          _
        // Predicated region
        $region29: #{mlp_forward.1} parent=11 // pred_check
          %p244 = pneg %p150
        $region30: #{mlp_forward.1} parent=11 // pred_check_branch
          %246 = sbr.rel (%p244) target = $region32
        $region31: #{mlp_forward.1} parent=11 // pred_region
          _
        $region32: #{mlp_forward.1} parent=11 // pred_fallthru
          _
        // Predicated region
        $region33: #{mlp_forward.1} parent=11 // pred_check
          %p247 = pneg %p171
        $region34: #{mlp_forward.1} parent=11 // pred_check_branch
          %249 = sbr.rel (%p247) target = $region36
        $region35: #{mlp_forward.1} parent=11 // pred_region
          _
        $region36: #{mlp_forward.1} parent=11 // pred_fallthru
          _
      $region12: #{mlp_forward.1} parent=5 // pred_fallthru
        _
      %p250 = scmp.lt.s32.totalorder %s19, 2
      // Predicated region
      $region37: #{mlp_forward.1} parent=5 // pred_check
        %p251 = pneg %p250
      $region38: #{mlp_forward.1} parent=5 // pred_check_branch
        %253 = sbr.rel (%p251) target = $region40
      $region39: #{mlp_forward.1} parent=5 // pred_region
        // Predicated region
        $region41: #{mlp_forward.1} parent=39 // pred_check
          %p254 = pneg %p39
        $region42: #{mlp_forward.1} parent=39 // pred_check_branch
          %256 = sbr.rel (%p254) target = $region44
        $region43: #{mlp_forward.1} parent=39 // pred_region
          %s257 = sand.u32 %s29, 1
          %s258 = scalar_lea.sflag [#allocation4], %s257
          %s259 = sand.u32 %s29, 1
          %s260 = smul.addr %s259, 1024
          %s261 = scalar_lea.vmem [#allocation3], %s260
          %s262 = smul.u32 32, %s19
          %s264 = ssub.s32 16384, 16384
          %265 = vsyncadd %s258, %s264
          %s266 = smul.addr %s262, 4
          %s267 = smul.addr %s266, 128
          %s268 = scalar_lea.hbm %s0, %s267
          %s269 = sshll.u32 %s261, 4
          %s270 = int_to_ptr.vmem [resolvable:$true] %s269
          %275 = dma.hbm_to_vmem [thread:$0]  %s268, 16384, %s270, %s258, 512, 512, 32
        $region44: #{mlp_forward.1} parent=39 // pred_fallthru
          _
      $region40: #{mlp_forward.1} parent=5 // pred_fallthru
        _
      %p276 = scmp.le.s32.totalorder 1, %s19
      %p277 = scmp.lt.s32.totalorder %s19, 3
      %p278 = pnand %p276, %p277
      %p279 = pneg %p278
      // Predicated region
      $region45: #{mlp_forward.1} parent=5 // pred_check
        _
      $region46: #{mlp_forward.1} parent=5 // pred_check_branch
        %281 = sbr.rel (%p278) target = $region48
      $region47: #{mlp_forward.1} parent=5 // pred_region
        %s282 = ssub.s32 %s19, 1
        %s283 = sand.u32 %s32, 1
        %s284 = scalar_lea.sflag [#allocation4], %s283
        %s285 = sand.u32 %s32, 1
        %s286 = smul.addr %s285, 1024
        %s287 = scalar_lea.vmem [#allocation3], %s286
        // Predicated region
        $region49: #{mlp_forward.1} parent=47 // pred_check
          %p288 = pneg %p45
        $region50: #{mlp_forward.1} parent=47 // pred_check_branch
          %290 = sbr.rel (%p288) target = $region52
        $region51: #{mlp_forward.1} parent=47 // pred_region
          %291 = dma.done %s284, 16384
        $region52: #{mlp_forward.1} parent=47 // pred_fallthru
          _
        // Predicated region
        $region53: #{mlp_forward.1} parent=47 // pred_check
          %p292 = pneg %p66
        $region54: #{mlp_forward.1} parent=47 // pred_check_branch
          %294 = sbr.rel (%p292) target = $region56
        $region55: #{mlp_forward.1} parent=47 // pred_region
          %295 = dma.done [#allocation6], 8192
        $region56: #{mlp_forward.1} parent=47 // pred_fallthru
          _
        // Predicated region
        $region57: #{mlp_forward.1} parent=47 // pred_check
          %p296 = pneg %p87
        $region58: #{mlp_forward.1} parent=47 // pred_check_branch
          %298 = sbr.rel (%p296) target = $region60
        $region59: #{mlp_forward.1} parent=47 // pred_region
          %299 = dma.done [#allocation6], 2048
        $region60: #{mlp_forward.1} parent=47 // pred_fallthru
          _
        %s300 = sand.u32 %s32, 1
        %s301 = scalar_lea.sflag [#allocation4], %s300
        %s302 = sand.u32 %s32, 1
        %s303 = smul.addr %s302, 1024
        %s304 = scalar_lea.vmem [#allocation3], %s303
        %p305 = pneg %p45
        %p306 = pneg %p42
        %p307 = pneg %p66
        %p308 = pneg %p63
        %p309 = pneg %p87
        %p310 = pneg %p84
        %p311 = pneg %p108
        %p312 = pneg %p105
        %p313 = pneg %p129
        %p314 = pneg %p126
        %p315 = pneg %p150
        %p316 = pneg %p147
        %p317 = pneg %p171
        %p318 = pneg %p168
        %p319 = pneg %p197
        %p320 = pneg %p194
        %s321 = smul.u32 32, %s24
        %p322 = scmp.lt.s32.totalorder %s321, 63
        %s323 = scalar_select %p322, %s321, 63
        %s324 = smul.addr %s323, 8
        %s325 = scalar_lea.vmem %s7, %s324
        %s326 = smul.u32 32, %s24
        %s327 = smul.u32 32, %s24
        %p328 = scmp.lt.s32.totalorder %s327, 63
        %s329 = scalar_select %p328, %s327, 63
        %s330 = smul.addr %s329, 8
        %s331 = scalar_lea.vmem %s7, %s330
        %s332 = smul.u32 32, %s24
        %v334 = vld [vmem:[%s287] sm:$0xff]
        %v335 = vld [vmem:[%s287 + $0x8] sm:$0xff]
        %v336 = vld [vmem:[%s287 + $0x10] sm:$0xff]
        %v337 = vld [vmem:[%s287 + $0x18] sm:$0xff]
        %v338 = vld [vmem:[%s287 + $0x20] sm:$0xff]
        %v339 = vld [vmem:[%s287 + $0x28] sm:$0xff]
        %v340 = vld [vmem:[%s287 + $0x30] sm:$0xff]
        %v341 = vld [vmem:[%s287 + $0x38] sm:$0xff]
        %v342 = vld [vmem:[%s287 + $0x40] sm:$0xff]
        %v343 = vld [vmem:[%s287 + $0x48] sm:$0xff]
        %v344 = vld [vmem:[%s287 + $0x50] sm:$0xff]
        %v345 = vld [vmem:[%s287 + $0x58] sm:$0xff]
        %v346 = vld [vmem:[%s287 + $0x60] sm:$0xff]
        %v347 = vld [vmem:[%s287 + $0x68] sm:$0xff]
        %v348 = vld [vmem:[%s287 + $0x70] sm:$0xff]
        %v349 = vld [vmem:[%s287 + $0x78] sm:$0xff]
        %v350 = vld [vmem:[%s287 + $0x80] sm:$0xff]
        %v351 = vld [vmem:[%s287 + $0x88] sm:$0xff]
        %v352 = vld [vmem:[%s287 + $0x90] sm:$0xff]
        %v353 = vld [vmem:[%s287 + $0x98] sm:$0xff]
        %v354 = vld [vmem:[%s287 + $0xa0] sm:$0xff]
        %v355 = vld [vmem:[%s287 + $0xa8] sm:$0xff]
        %v356 = vld [vmem:[%s287 + $0xb0] sm:$0xff]
        %v357 = vld [vmem:[%s287 + $0xb8] sm:$0xff]
        %v358 = vld [vmem:[%s287 + $0xc0] sm:$0xff]
        %v359 = vld [vmem:[%s287 + $0xc8] sm:$0xff]
        %v360 = vld [vmem:[%s287 + $0xd0] sm:$0xff]
        %v361 = vld [vmem:[%s287 + $0xd8] sm:$0xff]
        %v362 = vld [vmem:[%s287 + $0xe0] sm:$0xff]
        %v363 = vld [vmem:[%s287 + $0xe8] sm:$0xff]
        %v364 = vld [vmem:[%s287 + $0xf0] sm:$0xff]
        %v365 = vld [vmem:[%s287 + $0xf8] sm:$0xff]
        %v366 = vld [vmem:[%s287 + $0x100] sm:$0xff]
        %v367 = vld [vmem:[%s287 + $0x108] sm:$0xff]
        %v368 = vld [vmem:[%s287 + $0x110] sm:$0xff]
        %v369 = vld [vmem:[%s287 + $0x118] sm:$0xff]
        %v370 = vld [vmem:[%s287 + $0x120] sm:$0xff]
        %v371 = vld [vmem:[%s287 + $0x128] sm:$0xff]
        %v372 = vld [vmem:[%s287 + $0x130] sm:$0xff]
        %v373 = vld [vmem:[%s287 + $0x138] sm:$0xff]
        %v374 = vld [vmem:[%s287 + $0x140] sm:$0xff]
        %v375 = vld [vmem:[%s287 + $0x148] sm:$0xff]
        %v376 = vld [vmem:[%s287 + $0x150] sm:$0xff]
        %v377 = vld [vmem:[%s287 + $0x158] sm:$0xff]
        %v378 = vld [vmem:[%s287 + $0x160] sm:$0xff]
        %v379 = vld [vmem:[%s287 + $0x168] sm:$0xff]
        %v380 = vld [vmem:[%s287 + $0x170] sm:$0xff]
        %v381 = vld [vmem:[%s287 + $0x178] sm:$0xff]
        %v382 = vld [vmem:[%s287 + $0x180] sm:$0xff]
        %v383 = vld [vmem:[%s287 + $0x188] sm:$0xff]
        %v384 = vld [vmem:[%s287 + $0x190] sm:$0xff]
        %v385 = vld [vmem:[%s287 + $0x198] sm:$0xff]
        %v386 = vld [vmem:[%s287 + $0x1a0] sm:$0xff]
        %v387 = vld [vmem:[%s287 + $0x1a8] sm:$0xff]
        %v388 = vld [vmem:[%s287 + $0x1b0] sm:$0xff]
        %v389 = vld [vmem:[%s287 + $0x1b8] sm:$0xff]
        %v390 = vld [vmem:[%s287 + $0x1c0] sm:$0xff]
        %v391 = vld [vmem:[%s287 + $0x1c8] sm:$0xff]
        %v392 = vld [vmem:[%s287 + $0x1d0] sm:$0xff]
        %v393 = vld [vmem:[%s287 + $0x1d8] sm:$0xff]
        %v394 = vld [vmem:[%s287 + $0x1e0] sm:$0xff]
        %v395 = vld [vmem:[%s287 + $0x1e8] sm:$0xff]
        %v396 = vld [vmem:[%s287 + $0x1f0] sm:$0xff]
        %v397 = vld [vmem:[%s287 + $0x1f8] sm:$0xff]
        %v398 = vld [vmem:[%s287 + $0x200] sm:$0xff]
        %v399 = vld [vmem:[%s287 + $0x208] sm:$0xff]
        %v400 = vld [vmem:[%s287 + $0x210] sm:$0xff]
        %v401 = vld [vmem:[%s287 + $0x218] sm:$0xff]
        %v402 = vld [vmem:[%s287 + $0x220] sm:$0xff]
        %v403 = vld [vmem:[%s287 + $0x228] sm:$0xff]
        %v404 = vld [vmem:[%s287 + $0x230] sm:$0xff]
        %v405 = vld [vmem:[%s287 + $0x238] sm:$0xff]
        %v406 = vld [vmem:[%s287 + $0x240] sm:$0xff]
        %v407 = vld [vmem:[%s287 + $0x248] sm:$0xff]
        %v408 = vld [vmem:[%s287 + $0x250] sm:$0xff]
        %v409 = vld [vmem:[%s287 + $0x258] sm:$0xff]
        %v410 = vld [vmem:[%s287 + $0x260] sm:$0xff]
        %v411 = vld [vmem:[%s287 + $0x268] sm:$0xff]
        %v412 = vld [vmem:[%s287 + $0x270] sm:$0xff]
        %v413 = vld [vmem:[%s287 + $0x278] sm:$0xff]
        %v414 = vld [vmem:[%s287 + $0x280] sm:$0xff]
        %v415 = vld [vmem:[%s287 + $0x288] sm:$0xff]
        %v416 = vld [vmem:[%s287 + $0x290] sm:$0xff]
        %v417 = vld [vmem:[%s287 + $0x298] sm:$0xff]
        %v418 = vld [vmem:[%s287 + $0x2a0] sm:$0xff]
        %v419 = vld [vmem:[%s287 + $0x2a8] sm:$0xff]
        %v420 = vld [vmem:[%s287 + $0x2b0] sm:$0xff]
        %v421 = vld [vmem:[%s287 + $0x2b8] sm:$0xff]
        %v422 = vld [vmem:[%s287 + $0x2c0] sm:$0xff]
        %v423 = vld [vmem:[%s287 + $0x2c8] sm:$0xff]
        %v424 = vld [vmem:[%s287 + $0x2d0] sm:$0xff]
        %v425 = vld [vmem:[%s287 + $0x2d8] sm:$0xff]
        %v426 = vld [vmem:[%s287 + $0x2e0] sm:$0xff]
        %v427 = vld [vmem:[%s287 + $0x2e8] sm:$0xff]
        %v428 = vld [vmem:[%s287 + $0x2f0] sm:$0xff]
        %v429 = vld [vmem:[%s287 + $0x2f8] sm:$0xff]
        %v430 = vld [vmem:[%s287 + $0x300] sm:$0xff]
        %v431 = vld [vmem:[%s287 + $0x308] sm:$0xff]
        %v432 = vld [vmem:[%s287 + $0x310] sm:$0xff]
        %v433 = vld [vmem:[%s287 + $0x318] sm:$0xff]
        %v434 = vld [vmem:[%s287 + $0x320] sm:$0xff]
        %v435 = vld [vmem:[%s287 + $0x328] sm:$0xff]
        %v436 = vld [vmem:[%s287 + $0x330] sm:$0xff]
        %v437 = vld [vmem:[%s287 + $0x338] sm:$0xff]
        %v438 = vld [vmem:[%s287 + $0x340] sm:$0xff]
        %v439 = vld [vmem:[%s287 + $0x348] sm:$0xff]
        %v440 = vld [vmem:[%s287 + $0x350] sm:$0xff]
        %v441 = vld [vmem:[%s287 + $0x358] sm:$0xff]
        %v442 = vld [vmem:[%s287 + $0x360] sm:$0xff]
        %v443 = vld [vmem:[%s287 + $0x368] sm:$0xff]
        %v444 = vld [vmem:[%s287 + $0x370] sm:$0xff]
        %v445 = vld [vmem:[%s287 + $0x378] sm:$0xff]
        %v446 = vld [vmem:[%s287 + $0x380] sm:$0xff]
        %v447 = vld [vmem:[%s287 + $0x388] sm:$0xff]
        %v448 = vld [vmem:[%s287 + $0x390] sm:$0xff]
        %v449 = vld [vmem:[%s287 + $0x398] sm:$0xff]
        %v450 = vld [vmem:[%s287 + $0x3a0] sm:$0xff]
        %v451 = vld [vmem:[%s287 + $0x3a8] sm:$0xff]
        %v452 = vld [vmem:[%s287 + $0x3b0] sm:$0xff]
        %v453 = vld [vmem:[%s287 + $0x3b8] sm:$0xff]
        %v454 = vld [vmem:[%s287 + $0x3c0] sm:$0xff]
        %v455 = vld [vmem:[%s287 + $0x3c8] sm:$0xff]
        %v456 = vld [vmem:[%s287 + $0x3d0] sm:$0xff]
        %v457 = vld [vmem:[%s287 + $0x3d8] sm:$0xff]
        %v458 = vld [vmem:[%s287 + $0x3e0] sm:$0xff]
        %v459 = vld [vmem:[%s287 + $0x3e8] sm:$0xff]
        %v460 = vld [vmem:[%s287 + $0x3f0] sm:$0xff]
        %v461 = vld [vmem:[%s287 + $0x3f8] sm:$0xff]
        %v462 = vpack.c.bf16 %v338, %v334
        %v463 = vpack.c.bf16 %v339, %v335
        %v464 = vpack.c.bf16 %v340, %v336
        %v465 = vpack.c.bf16 %v341, %v337
        %v466 = vpack.c.bf16 %v346, %v342
        %v467 = vpack.c.bf16 %v347, %v343
        %v468 = vpack.c.bf16 %v348, %v344
        %v469 = vpack.c.bf16 %v349, %v345
        %v470 = vpack.c.bf16 %v354, %v350
        %v471 = vpack.c.bf16 %v355, %v351
        %v472 = vpack.c.bf16 %v356, %v352
        %v473 = vpack.c.bf16 %v357, %v353
        %v474 = vpack.c.bf16 %v362, %v358
        %v475 = vpack.c.bf16 %v363, %v359
        %v476 = vpack.c.bf16 %v364, %v360
        %v477 = vpack.c.bf16 %v365, %v361
        %v478 = vpack.c.bf16 %v370, %v366
        %v479 = vpack.c.bf16 %v371, %v367
        %v480 = vpack.c.bf16 %v372, %v368
        %v481 = vpack.c.bf16 %v373, %v369
        %v482 = vpack.c.bf16 %v378, %v374
        %v483 = vpack.c.bf16 %v379, %v375
        %v484 = vpack.c.bf16 %v380, %v376
        %v485 = vpack.c.bf16 %v381, %v377
        %v486 = vpack.c.bf16 %v386, %v382
        %v487 = vpack.c.bf16 %v387, %v383
        %v488 = vpack.c.bf16 %v388, %v384
        %v489 = vpack.c.bf16 %v389, %v385
        %v490 = vpack.c.bf16 %v394, %v390
        %v491 = vpack.c.bf16 %v395, %v391
        %v492 = vpack.c.bf16 %v396, %v392
        %v493 = vpack.c.bf16 %v397, %v393
        %v494 = vpack.c.bf16 %v402, %v398
        %v495 = vpack.c.bf16 %v403, %v399
        %v496 = vpack.c.bf16 %v404, %v400
        %v497 = vpack.c.bf16 %v405, %v401
        %v498 = vpack.c.bf16 %v410, %v406
        %v499 = vpack.c.bf16 %v411, %v407
        %v500 = vpack.c.bf16 %v412, %v408
        %v501 = vpack.c.bf16 %v413, %v409
        %v502 = vpack.c.bf16 %v418, %v414
        %v503 = vpack.c.bf16 %v419, %v415
        %v504 = vpack.c.bf16 %v420, %v416
        %v505 = vpack.c.bf16 %v421, %v417
        %v506 = vpack.c.bf16 %v426, %v422
        %v507 = vpack.c.bf16 %v427, %v423
        %v508 = vpack.c.bf16 %v428, %v424
        %v509 = vpack.c.bf16 %v429, %v425
        %v510 = vpack.c.bf16 %v434, %v430
        %v511 = vpack.c.bf16 %v435, %v431
        %v512 = vpack.c.bf16 %v436, %v432
        %v513 = vpack.c.bf16 %v437, %v433
        %v514 = vpack.c.bf16 %v442, %v438
        %v515 = vpack.c.bf16 %v443, %v439
        %v516 = vpack.c.bf16 %v444, %v440
        %v517 = vpack.c.bf16 %v445, %v441
        %v518 = vpack.c.bf16 %v450, %v446
        %v519 = vpack.c.bf16 %v451, %v447
        %v520 = vpack.c.bf16 %v452, %v448
        %v521 = vpack.c.bf16 %v453, %v449
        %v522 = vpack.c.bf16 %v458, %v454
        %v523 = vpack.c.bf16 %v459, %v455
        %v524 = vpack.c.bf16 %v460, %v456
        %v525 = vpack.c.bf16 %v461, %v457
        %v526 = vld [vmem:[#allocation5] sm:$0xff]
        %v527 = vld [vmem:[#allocation5 + $0x8] sm:$0xff]
        %v528 = vld [vmem:[#allocation5 + $0x10] sm:$0xff]
        %v529 = vld [vmem:[#allocation5 + $0x18] sm:$0xff]
        %v530 = vld [vmem:[#allocation5 + $0x20] sm:$0xff]
        %v531 = vld [vmem:[#allocation5 + $0x28] sm:$0xff]
        %v532 = vld [vmem:[#allocation5 + $0x30] sm:$0xff]
        %v533 = vld [vmem:[#allocation5 + $0x38] sm:$0xff]
        %v534 = vld [vmem:[#allocation5 + $0x40] sm:$0xff]
        %v535 = vld [vmem:[#allocation5 + $0x48] sm:$0xff]
        %v536 = vld [vmem:[#allocation5 + $0x50] sm:$0xff]
        %v537 = vld [vmem:[#allocation5 + $0x58] sm:$0xff]
        %v538 = vld [vmem:[#allocation5 + $0x60] sm:$0xff]
        %v539 = vld [vmem:[#allocation5 + $0x68] sm:$0xff]
        %v540 = vld [vmem:[#allocation5 + $0x70] sm:$0xff]
        %v541 = vld [vmem:[#allocation5 + $0x78] sm:$0xff]
        %v542 = vld [vmem:[#allocation5 + $0x80] sm:$0xff]
        %v543 = vld [vmem:[#allocation5 + $0x88] sm:$0xff]
        %v544 = vld [vmem:[#allocation5 + $0x90] sm:$0xff]
        %v545 = vld [vmem:[#allocation5 + $0x98] sm:$0xff]
        %v546 = vld [vmem:[#allocation5 + $0xa0] sm:$0xff]
        %v547 = vld [vmem:[#allocation5 + $0xa8] sm:$0xff]
        %v548 = vld [vmem:[#allocation5 + $0xb0] sm:$0xff]
        %v549 = vld [vmem:[#allocation5 + $0xb8] sm:$0xff]
        %v550 = vld [vmem:[#allocation5 + $0xc0] sm:$0xff]
        %v551 = vld [vmem:[#allocation5 + $0xc8] sm:$0xff]
        %v552 = vld [vmem:[#allocation5 + $0xd0] sm:$0xff]
        %v553 = vld [vmem:[#allocation5 + $0xd8] sm:$0xff]
        %v554 = vld [vmem:[#allocation5 + $0xe0] sm:$0xff]
        %v555 = vld [vmem:[#allocation5 + $0xe8] sm:$0xff]
        %v556 = vld [vmem:[#allocation5 + $0xf0] sm:$0xff]
        %v557 = vld [vmem:[#allocation5 + $0xf8] sm:$0xff]
        %v558 = vld [vmem:[#allocation5 + $0x100] sm:$0xff]
        %v559 = vld [vmem:[#allocation5 + $0x108] sm:$0xff]
        %v560 = vld [vmem:[#allocation5 + $0x110] sm:$0xff]
        %v561 = vld [vmem:[#allocation5 + $0x118] sm:$0xff]
        %v562 = vld [vmem:[#allocation5 + $0x120] sm:$0xff]
        %v563 = vld [vmem:[#allocation5 + $0x128] sm:$0xff]
        %v564 = vld [vmem:[#allocation5 + $0x130] sm:$0xff]
        %v565 = vld [vmem:[#allocation5 + $0x138] sm:$0xff]
        %v566 = vld [vmem:[#allocation5 + $0x140] sm:$0xff]
        %v567 = vld [vmem:[#allocation5 + $0x148] sm:$0xff]
        %v568 = vld [vmem:[#allocation5 + $0x150] sm:$0xff]
        %v569 = vld [vmem:[#allocation5 + $0x158] sm:$0xff]
        %v570 = vld [vmem:[#allocation5 + $0x160] sm:$0xff]
        %v571 = vld [vmem:[#allocation5 + $0x168] sm:$0xff]
        %v572 = vld [vmem:[#allocation5 + $0x170] sm:$0xff]
        %v573 = vld [vmem:[#allocation5 + $0x178] sm:$0xff]
        %v574 = vld [vmem:[#allocation5 + $0x180] sm:$0xff]
        %v575 = vld [vmem:[#allocation5 + $0x188] sm:$0xff]
        %v576 = vld [vmem:[#allocation5 + $0x190] sm:$0xff]
        %v577 = vld [vmem:[#allocation5 + $0x198] sm:$0xff]
        %v578 = vld [vmem:[#allocation5 + $0x1a0] sm:$0xff]
        %v579 = vld [vmem:[#allocation5 + $0x1a8] sm:$0xff]
        %v580 = vld [vmem:[#allocation5 + $0x1b0] sm:$0xff]
        %v581 = vld [vmem:[#allocation5 + $0x1b8] sm:$0xff]
        %v582 = vld [vmem:[#allocation5 + $0x1c0] sm:$0xff]
        %v583 = vld [vmem:[#allocation5 + $0x1c8] sm:$0xff]
        %v584 = vld [vmem:[#allocation5 + $0x1d0] sm:$0xff]
        %v585 = vld [vmem:[#allocation5 + $0x1d8] sm:$0xff]
        %v586 = vld [vmem:[#allocation5 + $0x1e0] sm:$0xff]
        %v587 = vld [vmem:[#allocation5 + $0x1e8] sm:$0xff]
        %v588 = vld [vmem:[#allocation5 + $0x1f0] sm:$0xff]
        %v589 = vld [vmem:[#allocation5 + $0x1f8] sm:$0xff]
        %v590 = vld [vmem:[%s4] sm:$0x3]
        %v592 = vlaneseq
        %v593 = vshrl.u32 %v592, 7
        %v594 = vsub.s32 0, %v593
        %v595 = vrot.slane %v590, %v594
        %v596 = vlaneseq
        %v597 = vshrl.u32 %v596, 7
        %v598 = vsub.s32 1, %v597
        %v599 = vrot.slane %v590, %v598
        %v666 = vunpack.c.l.b16 %v526
        %v667 = vunpack.c.h.b16 %v526
        %v668 = vunpack.c.l.b16 %v527
        %v669 = vunpack.c.h.b16 %v527
        %v670 = vunpack.c.l.b16 %v528
        %v671 = vunpack.c.h.b16 %v528
        %v672 = vunpack.c.l.b16 %v529
        %v673 = vunpack.c.h.b16 %v529
        %v674 = vunpack.c.l.b16 %v530
        %v675 = vunpack.c.h.b16 %v530
        %v676 = vunpack.c.l.b16 %v531
        %v677 = vunpack.c.h.b16 %v531
        %v678 = vunpack.c.l.b16 %v532
        %v679 = vunpack.c.h.b16 %v532
        %v680 = vunpack.c.l.b16 %v533
        %v681 = vunpack.c.h.b16 %v533
        %v682 = vunpack.c.l.b16 %v534
        %v683 = vunpack.c.h.b16 %v534
        %v684 = vunpack.c.l.b16 %v535
        %v685 = vunpack.c.h.b16 %v535
        %v686 = vunpack.c.l.b16 %v536
        %v687 = vunpack.c.h.b16 %v536
        %v688 = vunpack.c.l.b16 %v537
        %v689 = vunpack.c.h.b16 %v537
        %v690 = vunpack.c.l.b16 %v538
        %v691 = vunpack.c.h.b16 %v538
        %v692 = vunpack.c.l.b16 %v539
        %v693 = vunpack.c.h.b16 %v539
        %v694 = vunpack.c.l.b16 %v540
        %v695 = vunpack.c.h.b16 %v540
        %v696 = vunpack.c.l.b16 %v541
        %v697 = vunpack.c.h.b16 %v541
        %v698 = vunpack.c.l.b16 %v542
        %v699 = vunpack.c.h.b16 %v542
        %v700 = vunpack.c.l.b16 %v543
        %v701 = vunpack.c.h.b16 %v543
        %v702 = vunpack.c.l.b16 %v544
        %v703 = vunpack.c.h.b16 %v544
        %v704 = vunpack.c.l.b16 %v545
        %v705 = vunpack.c.h.b16 %v545
        %v706 = vunpack.c.l.b16 %v546
        %v707 = vunpack.c.h.b16 %v546
        %v708 = vunpack.c.l.b16 %v547
        %v709 = vunpack.c.h.b16 %v547
        %v710 = vunpack.c.l.b16 %v548
        %v711 = vunpack.c.h.b16 %v548
        %v712 = vunpack.c.l.b16 %v549
        %v713 = vunpack.c.h.b16 %v549
        %v714 = vunpack.c.l.b16 %v550
        %v715 = vunpack.c.h.b16 %v550
        %v716 = vunpack.c.l.b16 %v551
        %v717 = vunpack.c.h.b16 %v551
        %v718 = vunpack.c.l.b16 %v552
        %v719 = vunpack.c.h.b16 %v552
        %v720 = vunpack.c.l.b16 %v553
        %v721 = vunpack.c.h.b16 %v553
        %v722 = vunpack.c.l.b16 %v554
        %v723 = vunpack.c.h.b16 %v554
        %v724 = vunpack.c.l.b16 %v555
        %v725 = vunpack.c.h.b16 %v555
        %v726 = vunpack.c.l.b16 %v556
        %v727 = vunpack.c.h.b16 %v556
        %v728 = vunpack.c.l.b16 %v557
        %v729 = vunpack.c.h.b16 %v557
        %v730 = vunpack.c.l.b16 %v558
        %v731 = vunpack.c.h.b16 %v558
        %v732 = vunpack.c.l.b16 %v559
        %v733 = vunpack.c.h.b16 %v559
        %v734 = vunpack.c.l.b16 %v560
        %v735 = vunpack.c.h.b16 %v560
        %v736 = vunpack.c.l.b16 %v561
        %v737 = vunpack.c.h.b16 %v561
        %v738 = vunpack.c.l.b16 %v562
        %v739 = vunpack.c.h.b16 %v562
        %v740 = vunpack.c.l.b16 %v563
        %v741 = vunpack.c.h.b16 %v563
        %v742 = vunpack.c.l.b16 %v564
        %v743 = vunpack.c.h.b16 %v564
        %v744 = vunpack.c.l.b16 %v565
        %v745 = vunpack.c.h.b16 %v565
        %v746 = vunpack.c.l.b16 %v566
        %v747 = vunpack.c.h.b16 %v566
        %v748 = vunpack.c.l.b16 %v567
        %v749 = vunpack.c.h.b16 %v567
        %v750 = vunpack.c.l.b16 %v568
        %v751 = vunpack.c.h.b16 %v568
        %v752 = vunpack.c.l.b16 %v569
        %v753 = vunpack.c.h.b16 %v569
        %v754 = vunpack.c.l.b16 %v570
        %v755 = vunpack.c.h.b16 %v570
        %v756 = vunpack.c.l.b16 %v571
        %v757 = vunpack.c.h.b16 %v571
        %v758 = vunpack.c.l.b16 %v572
        %v759 = vunpack.c.h.b16 %v572
        %v760 = vunpack.c.l.b16 %v573
        %v761 = vunpack.c.h.b16 %v573
        %v762 = vunpack.c.l.b16 %v574
        %v763 = vunpack.c.h.b16 %v574
        %v764 = vunpack.c.l.b16 %v575
        %v765 = vunpack.c.h.b16 %v575
        %v766 = vunpack.c.l.b16 %v576
        %v767 = vunpack.c.h.b16 %v576
        %v768 = vunpack.c.l.b16 %v577
        %v769 = vunpack.c.h.b16 %v577
        %v770 = vunpack.c.l.b16 %v578
        %v771 = vunpack.c.h.b16 %v578
        %v772 = vunpack.c.l.b16 %v579
        %v773 = vunpack.c.h.b16 %v579
        %v774 = vunpack.c.l.b16 %v580
        %v775 = vunpack.c.h.b16 %v580
        %v776 = vunpack.c.l.b16 %v581
        %v777 = vunpack.c.h.b16 %v581
        %v778 = vunpack.c.l.b16 %v582
        %v779 = vunpack.c.h.b16 %v582
        %v780 = vunpack.c.l.b16 %v583
        %v781 = vunpack.c.h.b16 %v583
        %v782 = vunpack.c.l.b16 %v584
        %v783 = vunpack.c.h.b16 %v584
        %v784 = vunpack.c.l.b16 %v585
        %v785 = vunpack.c.h.b16 %v585
        %v786 = vunpack.c.l.b16 %v586
        %v787 = vunpack.c.h.b16 %v586
        %v788 = vunpack.c.l.b16 %v587
        %v789 = vunpack.c.h.b16 %v587
        %v790 = vunpack.c.l.b16 %v588
        %v791 = vunpack.c.h.b16 %v588
        %v792 = vunpack.c.l.b16 %v589
        %v793 = vunpack.c.h.b16 %v589
        %v794 = vpack.c.b16 %v668, %v666
        %v795 = vpack.c.b16 %v669, %v667
        %v796 = vpack.c.b16 %v672, %v670
        %v797 = vpack.c.b16 %v673, %v671
        %v798 = vpack.c.b16 %v676, %v674
        %v799 = vpack.c.b16 %v677, %v675
        %v800 = vpack.c.b16 %v680, %v678
        %v801 = vpack.c.b16 %v681, %v679
        %v802 = vpack.c.b16 %v684, %v682
        %v803 = vpack.c.b16 %v685, %v683
        %v804 = vpack.c.b16 %v688, %v686
        %v805 = vpack.c.b16 %v689, %v687
        %v806 = vpack.c.b16 %v692, %v690
        %v807 = vpack.c.b16 %v693, %v691
        %v808 = vpack.c.b16 %v696, %v694
        %v809 = vpack.c.b16 %v697, %v695
        %v810 = vpack.c.b16 %v700, %v698
        %v811 = vpack.c.b16 %v701, %v699
        %v812 = vpack.c.b16 %v704, %v702
        %v813 = vpack.c.b16 %v705, %v703
        %v814 = vpack.c.b16 %v708, %v706
        %v815 = vpack.c.b16 %v709, %v707
        %v816 = vpack.c.b16 %v712, %v710
        %v817 = vpack.c.b16 %v713, %v711
        %v818 = vpack.c.b16 %v716, %v714
        %v819 = vpack.c.b16 %v717, %v715
        %v820 = vpack.c.b16 %v720, %v718
        %v821 = vpack.c.b16 %v721, %v719
        %v822 = vpack.c.b16 %v724, %v722
        %v823 = vpack.c.b16 %v725, %v723
        %v824 = vpack.c.b16 %v728, %v726
        %v825 = vpack.c.b16 %v729, %v727
        %v826 = vpack.c.b16 %v732, %v730
        %v827 = vpack.c.b16 %v733, %v731
        %v828 = vpack.c.b16 %v736, %v734
        %v829 = vpack.c.b16 %v737, %v735
        %v830 = vpack.c.b16 %v740, %v738
        %v831 = vpack.c.b16 %v741, %v739
        %v832 = vpack.c.b16 %v744, %v742
        %v833 = vpack.c.b16 %v745, %v743
        %v834 = vpack.c.b16 %v748, %v746
        %v835 = vpack.c.b16 %v749, %v747
        %v836 = vpack.c.b16 %v752, %v750
        %v837 = vpack.c.b16 %v753, %v751
        %v838 = vpack.c.b16 %v756, %v754
        %v839 = vpack.c.b16 %v757, %v755
        %v840 = vpack.c.b16 %v760, %v758
        %v841 = vpack.c.b16 %v761, %v759
        %v842 = vpack.c.b16 %v764, %v762
        %v843 = vpack.c.b16 %v765, %v763
        %v844 = vpack.c.b16 %v768, %v766
        %v845 = vpack.c.b16 %v769, %v767
        %v846 = vpack.c.b16 %v772, %v770
        %v847 = vpack.c.b16 %v773, %v771
        %v848 = vpack.c.b16 %v776, %v774
        %v849 = vpack.c.b16 %v777, %v775
        %v850 = vpack.c.b16 %v780, %v778
        %v851 = vpack.c.b16 %v781, %v779
        %v852 = vpack.c.b16 %v784, %v782
        %v853 = vpack.c.b16 %v785, %v783
        %v854 = vpack.c.b16 %v788, %v786
        %v855 = vpack.c.b16 %v789, %v787
        %v856 = vpack.c.b16 %v792, %v790
        %v857 = vpack.c.b16 %v793, %v791
        %922 = vmatprep.subr.bf16.mxu0 %v795
        %923 = vmatpush1.bf16.msra.mxu0 %v794
        %924 = vmatprep.subr.bf16.mxu0 %v797
        %925 = vmatpush1.bf16.msra.mxu0 %v796
        %926 = vmatprep.subr.bf16.mxu0 %v799
        %927 = vmatpush1.bf16.msra.mxu0 %v798
        %928 = vmatprep.subr.bf16.mxu0 %v801
        %929 = vmatpush1.bf16.msra.mxu0 %v800
        %930 = vmatprep.subr.bf16.mxu0 %v803
        %931 = vmatpush1.bf16.msra.mxu0 %v802
        %932 = vmatprep.subr.bf16.mxu0 %v805
        %933 = vmatpush1.bf16.msra.mxu0 %v804
        %934 = vmatprep.subr.bf16.mxu0 %v807
        %935 = vmatpush1.bf16.msra.mxu0 %v806
        %936 = vmatprep.subr.bf16.mxu0 %v809
        %937 = vmatpush1.bf16.msra.mxu0 %v808
        %938 = vmatprep.subr.bf16.mxu0 %v811
        %939 = vmatpush1.bf16.msra.mxu0 %v810
        %940 = vmatprep.subr.bf16.mxu0 %v813
        %941 = vmatpush1.bf16.msra.mxu0 %v812
        %942 = vmatprep.subr.bf16.mxu0 %v815
        %943 = vmatpush1.bf16.msra.mxu0 %v814
        %944 = vmatprep.subr.bf16.mxu0 %v817
        %945 = vmatpush1.bf16.msra.mxu0 %v816
        %946 = vmatprep.subr.bf16.mxu0 %v819
        %947 = vmatpush1.bf16.msra.mxu0 %v818
        %948 = vmatprep.subr.bf16.mxu0 %v821
        %949 = vmatpush1.bf16.msra.mxu0 %v820
        %950 = vmatprep.subr.bf16.mxu0 %v823
        %951 = vmatpush1.bf16.msra.mxu0 %v822
        %952 = vmatprep.subr.bf16.mxu0 %v825
        %953 = vmatpush1.bf16.msra.mxu0 %v824
        %954 = vmatprep.mubr.bf16.mxu0 %v463
        %955 = vmatmul.mubr.bf16.gmra.mrb[0].mxu0 %v462
        %v956 = vpop.f32.mrb[0].mxu0
        %v957 = vadd.f32 %v595, %v956
        %v958 = vpop.f32.mrb[0].mxu0
        %v959 = vadd.f32 %v599, %v958
        %v960 = vpop.f32.mrb[0].mxu0
        %v961 = vadd.f32 %v595, %v960
        %v962 = vpop.f32.mrb[0].mxu0
        %v963 = vadd.f32 %v599, %v962
        %964 = vmatprep.mubr.bf16.mxu0 %v467
        %965 = vmatmul.mubr.bf16.gmra.mrb[0].mxu0 %v466
        %v966 = vpop.f32.mrb[0].mxu0
        %v967 = vadd.f32 %v595, %v966
        %v968 = vpop.f32.mrb[0].mxu0
        %v969 = vadd.f32 %v599, %v968
        %v970 = vpop.f32.mrb[0].mxu0
        %v971 = vadd.f32 %v595, %v970
        %v972 = vpop.f32.mrb[0].mxu0
        %v973 = vadd.f32 %v599, %v972
        %974 = vmatprep.mubr.bf16.mxu0 %v471
        %975 = vmatmul.mubr.bf16.gmra.mrb[0].mxu0 %v470
        %v976 = vpop.f32.mrb[0].mxu0
        %v977 = vadd.f32 %v595, %v976
        %v978 = vpop.f32.mrb[0].mxu0
        %v979 = vadd.f32 %v599, %v978
        %v980 = vpop.f32.mrb[0].mxu0
        %v981 = vadd.f32 %v595, %v980
        %v982 = vpop.f32.mrb[0].mxu0
        %v983 = vadd.f32 %v599, %v982
        %984 = vmatprep.mubr.bf16.mxu0 %v475
        %985 = vmatmul.mubr.bf16.gmra.mrb[0].mxu0 %v474
        %v986 = vpop.f32.mrb[0].mxu0
        %v987 = vadd.f32 %v595, %v986
        %v988 = vpop.f32.mrb[0].mxu0
        %v989 = vadd.f32 %v599, %v988
        %v990 = vpop.f32.mrb[0].mxu0
        %v991 = vadd.f32 %v595, %v990
        %v992 = vpop.f32.mrb[0].mxu0
        %v993 = vadd.f32 %v599, %v992
        %994 = vmatprep.mubr.bf16.mxu0 %v479
        %995 = vmatmul.mubr.bf16.gmra.mrb[0].mxu0 %v478
        %v996 = vpop.f32.mrb[0].mxu0
        %v997 = vadd.f32 %v595, %v996
        %v998 = vpop.f32.mrb[0].mxu0
        %v999 = vadd.f32 %v599, %v998
        %v1000 = vpop.f32.mrb[0].mxu0
        %v1001 = vadd.f32 %v595, %v1000
        %v1002 = vpop.f32.mrb[0].mxu0
        %v1003 = vadd.f32 %v599, %v1002
        %1004 = vmatprep.mubr.bf16.mxu0 %v483
        %1005 = vmatmul.mubr.bf16.gmra.mrb[0].mxu0 %v482
        %v1006 = vpop.f32.mrb[0].mxu0
        %v1007 = vadd.f32 %v595, %v1006
        %v1008 = vpop.f32.mrb[0].mxu0
        %v1009 = vadd.f32 %v599, %v1008
        %v1010 = vpop.f32.mrb[0].mxu0
        %v1011 = vadd.f32 %v595, %v1010
        %v1012 = vpop.f32.mrb[0].mxu0
        %v1013 = vadd.f32 %v599, %v1012
        %1014 = vmatprep.mubr.bf16.mxu0 %v487
        %1015 = vmatmul.mubr.bf16.gmra.mrb[0].mxu0 %v486
        %v1016 = vpop.f32.mrb[0].mxu0
        %v1017 = vadd.f32 %v595, %v1016
        %v1018 = vpop.f32.mrb[0].mxu0
        %v1019 = vadd.f32 %v599, %v1018
        %v1020 = vpop.f32.mrb[0].mxu0
        %v1021 = vadd.f32 %v595, %v1020
        %v1022 = vpop.f32.mrb[0].mxu0
        %v1023 = vadd.f32 %v599, %v1022
        %1024 = vmatprep.mubr.bf16.mxu0 %v491
        %1025 = vmatmul.mubr.bf16.gmra.mrb[0].mxu0 %v490
        %v1026 = vpop.f32.mrb[0].mxu0
        %v1027 = vadd.f32 %v595, %v1026
        %v1028 = vpop.f32.mrb[0].mxu0
        %v1029 = vadd.f32 %v599, %v1028
        %v1030 = vpop.f32.mrb[0].mxu0
        %v1031 = vadd.f32 %v595, %v1030
        %v1032 = vpop.f32.mrb[0].mxu0
        %v1033 = vadd.f32 %v599, %v1032
        %1034 = vmatprep.mubr.bf16.mxu0 %v495
        %1035 = vmatmul.mubr.bf16.gmra.mrb[0].mxu0 %v494
        %v1036 = vpop.f32.mrb[0].mxu0
        %v1037 = vadd.f32 %v595, %v1036
        %v1038 = vpop.f32.mrb[0].mxu0
        %v1039 = vadd.f32 %v599, %v1038
        %v1040 = vpop.f32.mrb[0].mxu0
        %v1041 = vadd.f32 %v595, %v1040
        %v1042 = vpop.f32.mrb[0].mxu0
        %v1043 = vadd.f32 %v599, %v1042
        %1044 = vmatprep.mubr.bf16.mxu0 %v499
        %1045 = vmatmul.mubr.bf16.gmra.mrb[0].mxu0 %v498
        %v1046 = vpop.f32.mrb[0].mxu0
        %v1047 = vadd.f32 %v595, %v1046
        %v1048 = vpop.f32.mrb[0].mxu0
        %v1049 = vadd.f32 %v599, %v1048
        %v1050 = vpop.f32.mrb[0].mxu0
        %v1051 = vadd.f32 %v595, %v1050
        %v1052 = vpop.f32.mrb[0].mxu0
        %v1053 = vadd.f32 %v599, %v1052
        %1054 = vmatprep.mubr.bf16.mxu0 %v503
        %1055 = vmatmul.mubr.bf16.gmra.mrb[0].mxu0 %v502
        %v1056 = vpop.f32.mrb[0].mxu0
        %v1057 = vadd.f32 %v595, %v1056
        %v1058 = vpop.f32.mrb[0].mxu0
        %v1059 = vadd.f32 %v599, %v1058
        %v1060 = vpop.f32.mrb[0].mxu0
        %v1061 = vadd.f32 %v595, %v1060
        %v1062 = vpop.f32.mrb[0].mxu0
        %v1063 = vadd.f32 %v599, %v1062
        %1064 = vmatprep.mubr.bf16.mxu0 %v507
        %1065 = vmatmul.mubr.bf16.gmra.mrb[0].mxu0 %v506
        %v1066 = vpop.f32.mrb[0].mxu0
        %v1067 = vadd.f32 %v595, %v1066
        %v1068 = vpop.f32.mrb[0].mxu0
        %v1069 = vadd.f32 %v599, %v1068
        %v1070 = vpop.f32.mrb[0].mxu0
        %v1071 = vadd.f32 %v595, %v1070
        %v1072 = vpop.f32.mrb[0].mxu0
        %v1073 = vadd.f32 %v599, %v1072
        %1074 = vmatprep.mubr.bf16.mxu0 %v511
        %1075 = vmatmul.mubr.bf16.gmra.mrb[0].mxu0 %v510
        %v1076 = vpop.f32.mrb[0].mxu0
        %v1077 = vadd.f32 %v595, %v1076
        %v1078 = vpop.f32.mrb[0].mxu0
        %v1079 = vadd.f32 %v599, %v1078
        %v1080 = vpop.f32.mrb[0].mxu0
        %v1081 = vadd.f32 %v595, %v1080
        %v1082 = vpop.f32.mrb[0].mxu0
        %v1083 = vadd.f32 %v599, %v1082
        %1084 = vmatprep.mubr.bf16.mxu0 %v515
        %1085 = vmatmul.mubr.bf16.gmra.mrb[0].mxu0 %v514
        %v1086 = vpop.f32.mrb[0].mxu0
        %v1087 = vadd.f32 %v595, %v1086
        %v1088 = vpop.f32.mrb[0].mxu0
        %v1089 = vadd.f32 %v599, %v1088
        %v1090 = vpop.f32.mrb[0].mxu0
        %v1091 = vadd.f32 %v595, %v1090
        %v1092 = vpop.f32.mrb[0].mxu0
        %v1093 = vadd.f32 %v599, %v1092
        %1094 = vmatprep.mubr.bf16.mxu0 %v519
        %1095 = vmatmul.mubr.bf16.gmra.mrb[0].mxu0 %v518
        %v1096 = vpop.f32.mrb[0].mxu0
        %v1097 = vadd.f32 %v595, %v1096
        %v1098 = vpop.f32.mrb[0].mxu0
        %v1099 = vadd.f32 %v599, %v1098
        %v1100 = vpop.f32.mrb[0].mxu0
        %v1101 = vadd.f32 %v595, %v1100
        %v1102 = vpop.f32.mrb[0].mxu0
        %v1103 = vadd.f32 %v599, %v1102
        %1104 = vmatprep.mubr.bf16.mxu0 %v523
        %1105 = vmatmul.mubr.bf16.gmra.mrb[0].mxu0 %v522
        %v1106 = vpop.f32.mrb[0].mxu0
        %v1107 = vadd.f32 %v595, %v1106
        %v1108 = vpop.f32.mrb[0].mxu0
        %v1109 = vadd.f32 %v599, %v1108
        %v1110 = vpop.f32.mrb[0].mxu0
        %v1111 = vadd.f32 %v595, %v1110
        %v1112 = vpop.f32.mrb[0].mxu0
        %v1113 = vadd.f32 %v599, %v1112
        %1114 = vdwg.mxu0
        %1115 = vmatprep.subr.bf16.mxu0 %v827
        %1116 = vmatpush1.bf16.msra.mxu0 %v826
        %1117 = vmatprep.subr.bf16.mxu0 %v829
        %1118 = vmatpush1.bf16.msra.mxu0 %v828
        %1119 = vmatprep.subr.bf16.mxu0 %v831
        %1120 = vmatpush1.bf16.msra.mxu0 %v830
        %1121 = vmatprep.subr.bf16.mxu0 %v833
        %1122 = vmatpush1.bf16.msra.mxu0 %v832
        %1123 = vmatprep.subr.bf16.mxu0 %v835
        %1124 = vmatpush1.bf16.msra.mxu0 %v834
        %1125 = vmatprep.subr.bf16.mxu0 %v837
        %1126 = vmatpush1.bf16.msra.mxu0 %v836
        %1127 = vmatprep.subr.bf16.mxu0 %v839
        %1128 = vmatpush1.bf16.msra.mxu0 %v838
        %1129 = vmatprep.subr.bf16.mxu0 %v841
        %1130 = vmatpush1.bf16.msra.mxu0 %v840
        %1131 = vmatprep.subr.bf16.mxu0 %v843
        %1132 = vmatpush1.bf16.msra.mxu0 %v842
        %1133 = vmatprep.subr.bf16.mxu0 %v845
        %1134 = vmatpush1.bf16.msra.mxu0 %v844
        %1135 = vmatprep.subr.bf16.mxu0 %v847
        %1136 = vmatpush1.bf16.msra.mxu0 %v846
        %1137 = vmatprep.subr.bf16.mxu0 %v849
        %1138 = vmatpush1.bf16.msra.mxu0 %v848
        %1139 = vmatprep.subr.bf16.mxu0 %v851
        %1140 = vmatpush1.bf16.msra.mxu0 %v850
        %1141 = vmatprep.subr.bf16.mxu0 %v853
        %1142 = vmatpush1.bf16.msra.mxu0 %v852
        %1143 = vmatprep.subr.bf16.mxu0 %v855
        %1144 = vmatpush1.bf16.msra.mxu0 %v854
        %1145 = vmatprep.subr.bf16.mxu0 %v857
        %1146 = vmatpush1.bf16.msra.mxu0 %v856
        %1147 = vmatprep.mubr.bf16.mxu0 %v465
        %1148 = vmatmul.mubr.bf16.gmra.mrb[0].mxu0 %v464
        %v1149 = vpop.f32.mrb[0].mxu0
        %v1150 = vadd.f32 %v957, %v1149
        %v1151 = vpop.f32.mrb[0].mxu0
        %v1152 = vadd.f32 %v959, %v1151
        %v1153 = vpop.f32.mrb[0].mxu0
        %v1154 = vadd.f32 %v961, %v1153
        %v1155 = vpop.f32.mrb[0].mxu0
        %v1156 = vadd.f32 %v963, %v1155
        %1157 = vmatprep.mubr.bf16.mxu0 %v469
        %1158 = vmatmul.mubr.bf16.gmra.mrb[0].mxu0 %v468
        %v1159 = vpop.f32.mrb[0].mxu0
        %v1160 = vadd.f32 %v967, %v1159
        %v1161 = vpop.f32.mrb[0].mxu0
        %v1162 = vadd.f32 %v969, %v1161
        %v1163 = vpop.f32.mrb[0].mxu0
        %v1164 = vadd.f32 %v971, %v1163
        %v1165 = vpop.f32.mrb[0].mxu0
        %v1166 = vadd.f32 %v973, %v1165
        %1167 = vmatprep.mubr.bf16.mxu0 %v473
        %1168 = vmatmul.mubr.bf16.gmra.mrb[0].mxu0 %v472
        %v1169 = vpop.f32.mrb[0].mxu0
        %v1170 = vadd.f32 %v977, %v1169
        %v1171 = vpop.f32.mrb[0].mxu0
        %v1172 = vadd.f32 %v979, %v1171
        %v1173 = vpop.f32.mrb[0].mxu0
        %v1174 = vadd.f32 %v981, %v1173
        %v1175 = vpop.f32.mrb[0].mxu0
        %v1176 = vadd.f32 %v983, %v1175
        %1177 = vmatprep.mubr.bf16.mxu0 %v477
        %1178 = vmatmul.mubr.bf16.gmra.mrb[0].mxu0 %v476
        %v1179 = vpop.f32.mrb[0].mxu0
        %v1180 = vadd.f32 %v987, %v1179
        %v1181 = vpop.f32.mrb[0].mxu0
        %v1182 = vadd.f32 %v989, %v1181
        %v1183 = vpop.f32.mrb[0].mxu0
        %v1184 = vadd.f32 %v991, %v1183
        %v1185 = vpop.f32.mrb[0].mxu0
        %v1186 = vadd.f32 %v993, %v1185
        %1187 = vmatprep.mubr.bf16.mxu0 %v481
        %1188 = vmatmul.mubr.bf16.gmra.mrb[0].mxu0 %v480
        %v1189 = vpop.f32.mrb[0].mxu0
        %v1190 = vadd.f32 %v997, %v1189
        %v1191 = vpop.f32.mrb[0].mxu0
        %v1192 = vadd.f32 %v999, %v1191
        %v1193 = vpop.f32.mrb[0].mxu0
        %v1194 = vadd.f32 %v1001, %v1193
        %v1195 = vpop.f32.mrb[0].mxu0
        %v1196 = vadd.f32 %v1003, %v1195
        %1197 = vmatprep.mubr.bf16.mxu0 %v485
        %1198 = vmatmul.mubr.bf16.gmra.mrb[0].mxu0 %v484
        %v1199 = vpop.f32.mrb[0].mxu0
        %v1200 = vadd.f32 %v1007, %v1199
        %v1201 = vpop.f32.mrb[0].mxu0
        %v1202 = vadd.f32 %v1009, %v1201
        %v1203 = vpop.f32.mrb[0].mxu0
        %v1204 = vadd.f32 %v1011, %v1203
        %v1205 = vpop.f32.mrb[0].mxu0
        %v1206 = vadd.f32 %v1013, %v1205
        %1207 = vmatprep.mubr.bf16.mxu0 %v489
        %1208 = vmatmul.mubr.bf16.gmra.mrb[0].mxu0 %v488
        %v1209 = vpop.f32.mrb[0].mxu0
        %v1210 = vadd.f32 %v1017, %v1209
        %v1211 = vpop.f32.mrb[0].mxu0
        %v1212 = vadd.f32 %v1019, %v1211
        %v1213 = vpop.f32.mrb[0].mxu0
        %v1214 = vadd.f32 %v1021, %v1213
        %v1215 = vpop.f32.mrb[0].mxu0
        %v1216 = vadd.f32 %v1023, %v1215
        %1217 = vmatprep.mubr.bf16.mxu0 %v493
        %1218 = vmatmul.mubr.bf16.gmra.mrb[0].mxu0 %v492
        %v1219 = vpop.f32.mrb[0].mxu0
        %v1220 = vadd.f32 %v1027, %v1219
        %v1221 = vpop.f32.mrb[0].mxu0
        %v1222 = vadd.f32 %v1029, %v1221
        %v1223 = vpop.f32.mrb[0].mxu0
        %v1224 = vadd.f32 %v1031, %v1223
        %v1225 = vpop.f32.mrb[0].mxu0
        %v1226 = vadd.f32 %v1033, %v1225
        %1227 = vmatprep.mubr.bf16.mxu0 %v497
        %1228 = vmatmul.mubr.bf16.gmra.mrb[0].mxu0 %v496
        %v1229 = vpop.f32.mrb[0].mxu0
        %v1230 = vadd.f32 %v1037, %v1229
        %v1231 = vpop.f32.mrb[0].mxu0
        %v1232 = vadd.f32 %v1039, %v1231
        %v1233 = vpop.f32.mrb[0].mxu0
        %v1234 = vadd.f32 %v1041, %v1233
        %v1235 = vpop.f32.mrb[0].mxu0
        %v1236 = vadd.f32 %v1043, %v1235
        %1237 = vmatprep.mubr.bf16.mxu0 %v501
        %1238 = vmatmul.mubr.bf16.gmra.mrb[0].mxu0 %v500
        %v1239 = vpop.f32.mrb[0].mxu0
        %v1240 = vadd.f32 %v1047, %v1239
        %v1241 = vpop.f32.mrb[0].mxu0
        %v1242 = vadd.f32 %v1049, %v1241
        %v1243 = vpop.f32.mrb[0].mxu0
        %v1244 = vadd.f32 %v1051, %v1243
        %v1245 = vpop.f32.mrb[0].mxu0
        %v1246 = vadd.f32 %v1053, %v1245
        %1247 = vmatprep.mubr.bf16.mxu0 %v505
        %1248 = vmatmul.mubr.bf16.gmra.mrb[0].mxu0 %v504
        %v1249 = vpop.f32.mrb[0].mxu0
        %v1250 = vadd.f32 %v1057, %v1249
        %v1251 = vpop.f32.mrb[0].mxu0
        %v1252 = vadd.f32 %v1059, %v1251
        %v1253 = vpop.f32.mrb[0].mxu0
        %v1254 = vadd.f32 %v1061, %v1253
        %v1255 = vpop.f32.mrb[0].mxu0
        %v1256 = vadd.f32 %v1063, %v1255
        %1257 = vmatprep.mubr.bf16.mxu0 %v509
        %1258 = vmatmul.mubr.bf16.gmra.mrb[0].mxu0 %v508
        %v1259 = vpop.f32.mrb[0].mxu0
        %v1260 = vadd.f32 %v1067, %v1259
        %v1261 = vpop.f32.mrb[0].mxu0
        %v1262 = vadd.f32 %v1069, %v1261
        %v1263 = vpop.f32.mrb[0].mxu0
        %v1264 = vadd.f32 %v1071, %v1263
        %v1265 = vpop.f32.mrb[0].mxu0
        %v1266 = vadd.f32 %v1073, %v1265
        %1267 = vmatprep.mubr.bf16.mxu0 %v513
        %1268 = vmatmul.mubr.bf16.gmra.mrb[0].mxu0 %v512
        %v1269 = vpop.f32.mrb[0].mxu0
        %v1270 = vadd.f32 %v1077, %v1269
        %v1271 = vpop.f32.mrb[0].mxu0
        %v1272 = vadd.f32 %v1079, %v1271
        %v1273 = vpop.f32.mrb[0].mxu0
        %v1274 = vadd.f32 %v1081, %v1273
        %v1275 = vpop.f32.mrb[0].mxu0
        %v1276 = vadd.f32 %v1083, %v1275
        %1277 = vmatprep.mubr.bf16.mxu0 %v517
        %1278 = vmatmul.mubr.bf16.gmra.mrb[0].mxu0 %v516
        %v1279 = vpop.f32.mrb[0].mxu0
        %v1280 = vadd.f32 %v1087, %v1279
        %v1281 = vpop.f32.mrb[0].mxu0
        %v1282 = vadd.f32 %v1089, %v1281
        %v1283 = vpop.f32.mrb[0].mxu0
        %v1284 = vadd.f32 %v1091, %v1283
        %v1285 = vpop.f32.mrb[0].mxu0
        %v1286 = vadd.f32 %v1093, %v1285
        %1287 = vmatprep.mubr.bf16.mxu0 %v521
        %1288 = vmatmul.mubr.bf16.gmra.mrb[0].mxu0 %v520
        %v1289 = vpop.f32.mrb[0].mxu0
        %v1290 = vadd.f32 %v1097, %v1289
        %v1291 = vpop.f32.mrb[0].mxu0
        %v1292 = vadd.f32 %v1099, %v1291
        %v1293 = vpop.f32.mrb[0].mxu0
        %v1294 = vadd.f32 %v1101, %v1293
        %v1295 = vpop.f32.mrb[0].mxu0
        %v1296 = vadd.f32 %v1103, %v1295
        %1297 = vmatprep.mubr.bf16.mxu0 %v525
        %1298 = vmatmul.mubr.bf16.gmra.mrb[0].mxu0 %v524
        %v1299 = vpop.f32.mrb[0].mxu0
        %v1300 = vadd.f32 %v1107, %v1299
        %v1301 = vpop.f32.mrb[0].mxu0
        %v1302 = vadd.f32 %v1109, %v1301
        %v1303 = vpop.f32.mrb[0].mxu0
        %v1304 = vadd.f32 %v1111, %v1303
        %v1305 = vpop.f32.mrb[0].mxu0
        %v1306 = vadd.f32 %v1113, %v1305
        %1307 = vdwg.mxu0
        %v1308 = vpack.c.bf16 %v1154, %v1150
        %v1309 = vpack.c.bf16 %v1156, %v1152
        %v1310 = vpack.c.bf16 %v1164, %v1160
        %v1311 = vpack.c.bf16 %v1166, %v1162
        %v1312 = vpack.c.bf16 %v1174, %v1170
        %v1313 = vpack.c.bf16 %v1176, %v1172
        %v1314 = vpack.c.bf16 %v1184, %v1180
        %v1315 = vpack.c.bf16 %v1186, %v1182
        %v1316 = vpack.c.bf16 %v1194, %v1190
        %v1317 = vpack.c.bf16 %v1196, %v1192
        %v1318 = vpack.c.bf16 %v1204, %v1200
        %v1319 = vpack.c.bf16 %v1206, %v1202
        %v1320 = vpack.c.bf16 %v1214, %v1210
        %v1321 = vpack.c.bf16 %v1216, %v1212
        %v1322 = vpack.c.bf16 %v1224, %v1220
        %v1323 = vpack.c.bf16 %v1226, %v1222
        %v1324 = vpack.c.bf16 %v1234, %v1230
        %v1325 = vpack.c.bf16 %v1236, %v1232
        %v1326 = vpack.c.bf16 %v1244, %v1240
        %v1327 = vpack.c.bf16 %v1246, %v1242
        %v1328 = vpack.c.bf16 %v1254, %v1250
        %v1329 = vpack.c.bf16 %v1256, %v1252
        %v1330 = vpack.c.bf16 %v1264, %v1260
        %v1331 = vpack.c.bf16 %v1266, %v1262
        %v1332 = vpack.c.bf16 %v1274, %v1270
        %v1333 = vpack.c.bf16 %v1276, %v1272
        %v1334 = vpack.c.bf16 %v1284, %v1280
        %v1335 = vpack.c.bf16 %v1286, %v1282
        %v1336 = vpack.c.bf16 %v1294, %v1290
        %v1337 = vpack.c.bf16 %v1296, %v1292
        %v1338 = vpack.c.bf16 %v1304, %v1300
        %v1339 = vpack.c.bf16 %v1306, %v1302
        %v1340 = vld [vmem:[#allocation7] sm:$0xf]
        %v1341 = vld [vmem:[#allocation7 + $0x4] sm:$0xf]
        %v1342 = vld [vmem:[#allocation7 + $0x8] sm:$0xf]
        %v1343 = vld [vmem:[#allocation7 + $0xc] sm:$0xf]
        %v1344 = vld [vmem:[#allocation7 + $0x10] sm:$0xf]
        %v1345 = vld [vmem:[#allocation7 + $0x14] sm:$0xf]
        %v1346 = vld [vmem:[#allocation7 + $0x18] sm:$0xf]
        %v1347 = vld [vmem:[#allocation7 + $0x1c] sm:$0xf]
        %v1348 = vld [vmem:[#allocation7 + $0x20] sm:$0xf]
        %v1349 = vld [vmem:[#allocation7 + $0x24] sm:$0xf]
        %v1350 = vld [vmem:[#allocation7 + $0x28] sm:$0xf]
        %v1351 = vld [vmem:[#allocation7 + $0x2c] sm:$0xf]
        %v1352 = vld [vmem:[#allocation7 + $0x30] sm:$0xf]
        %v1353 = vld [vmem:[#allocation7 + $0x34] sm:$0xf]
        %v1354 = vld [vmem:[#allocation7 + $0x38] sm:$0xf]
        %v1355 = vld [vmem:[#allocation7 + $0x3c] sm:$0xf]
        %v1356 = vld [vmem:[#allocation7 + $0x40] sm:$0xf]
        %v1357 = vld [vmem:[#allocation7 + $0x44] sm:$0xf]
        %v1358 = vld [vmem:[#allocation7 + $0x48] sm:$0xf]
        %v1359 = vld [vmem:[#allocation7 + $0x4c] sm:$0xf]
        %v1360 = vld [vmem:[#allocation7 + $0x50] sm:$0xf]
        %v1361 = vld [vmem:[#allocation7 + $0x54] sm:$0xf]
        %v1362 = vld [vmem:[#allocation7 + $0x58] sm:$0xf]
        %v1363 = vld [vmem:[#allocation7 + $0x5c] sm:$0xf]
        %v1364 = vld [vmem:[#allocation7 + $0x60] sm:$0xf]
        %v1365 = vld [vmem:[#allocation7 + $0x64] sm:$0xf]
        %v1366 = vld [vmem:[#allocation7 + $0x68] sm:$0xf]
        %v1367 = vld [vmem:[#allocation7 + $0x6c] sm:$0xf]
        %v1368 = vld [vmem:[#allocation7 + $0x70] sm:$0xf]
        %v1369 = vld [vmem:[#allocation7 + $0x74] sm:$0xf]
        %v1370 = vld [vmem:[#allocation7 + $0x78] sm:$0xf]
        %v1371 = vld [vmem:[#allocation7 + $0x7c] sm:$0xf]
        %v1372 = vld [vmem:[%s5] sm:$0x1]
        %v1374 = vlaneseq
        %v1375 = vshrl.u32 %v1374, 7
        %v1376 = vsub.s32 0, %v1375
        %v1377 = vrot.slane %v1372, %v1376
        %v1411 = vunpack.c.l.b16 %v1340
        %v1412 = vunpack.c.l.b16 %v1341
        %v1413 = vunpack.c.l.b16 %v1342
        %v1414 = vunpack.c.l.b16 %v1343
        %v1415 = vunpack.c.l.b16 %v1344
        %v1416 = vunpack.c.l.b16 %v1345
        %v1417 = vunpack.c.l.b16 %v1346
        %v1418 = vunpack.c.l.b16 %v1347
        %v1419 = vunpack.c.l.b16 %v1348
        %v1420 = vunpack.c.l.b16 %v1349
        %v1421 = vunpack.c.l.b16 %v1350
        %v1422 = vunpack.c.l.b16 %v1351
        %v1423 = vunpack.c.l.b16 %v1352
        %v1424 = vunpack.c.l.b16 %v1353
        %v1425 = vunpack.c.l.b16 %v1354
        %v1426 = vunpack.c.l.b16 %v1355
        %v1427 = vunpack.c.l.b16 %v1356
        %v1428 = vunpack.c.l.b16 %v1357
        %v1429 = vunpack.c.l.b16 %v1358
        %v1430 = vunpack.c.l.b16 %v1359
        %v1431 = vunpack.c.l.b16 %v1360
        %v1432 = vunpack.c.l.b16 %v1361
        %v1433 = vunpack.c.l.b16 %v1362
        %v1434 = vunpack.c.l.b16 %v1363
        %v1435 = vunpack.c.l.b16 %v1364
        %v1436 = vunpack.c.l.b16 %v1365
        %v1437 = vunpack.c.l.b16 %v1366
        %v1438 = vunpack.c.l.b16 %v1367
        %v1439 = vunpack.c.l.b16 %v1368
        %v1440 = vunpack.c.l.b16 %v1369
        %v1441 = vunpack.c.l.b16 %v1370
        %v1442 = vunpack.c.l.b16 %v1371
        %v1443 = vpack.c.b16 %v1412, %v1411
        %v1444 = vpack.c.b16 %v1414, %v1413
        %v1445 = vpack.c.b16 %v1416, %v1415
        %v1446 = vpack.c.b16 %v1418, %v1417
        %v1447 = vpack.c.b16 %v1420, %v1419
        %v1448 = vpack.c.b16 %v1422, %v1421
        %v1449 = vpack.c.b16 %v1424, %v1423
        %v1450 = vpack.c.b16 %v1426, %v1425
        %v1451 = vpack.c.b16 %v1428, %v1427
        %v1452 = vpack.c.b16 %v1430, %v1429
        %v1453 = vpack.c.b16 %v1432, %v1431
        %v1454 = vpack.c.b16 %v1434, %v1433
        %v1455 = vpack.c.b16 %v1436, %v1435
        %v1456 = vpack.c.b16 %v1438, %v1437
        %v1457 = vpack.c.b16 %v1440, %v1439
        %v1458 = vpack.c.b16 %v1442, %v1441
        %1475 = vmatprep.subr.bf16.mxu0 0
        %1476 = vmatpush1.bf16.msra.mxu0 %v1443
        %1477 = vmatprep.subr.bf16.mxu0 0
        %1478 = vmatpush1.bf16.msra.mxu0 %v1444
        %1479 = vmatprep.subr.bf16.mxu0 0
        %1480 = vmatpush1.bf16.msra.mxu0 %v1445
        %1481 = vmatprep.subr.bf16.mxu0 0
        %1482 = vmatpush1.bf16.msra.mxu0 %v1446
        %1483 = vmatprep.subr.bf16.mxu0 0
        %1484 = vmatpush1.bf16.msra.mxu0 %v1447
        %1485 = vmatprep.subr.bf16.mxu0 0
        %1486 = vmatpush1.bf16.msra.mxu0 %v1448
        %1487 = vmatprep.subr.bf16.mxu0 0
        %1488 = vmatpush1.bf16.msra.mxu0 %v1449
        %1489 = vmatprep.subr.bf16.mxu0 0
        %1490 = vmatpush1.bf16.msra.mxu0 %v1450
        %1491 = vmatprep.subr.bf16.mxu0 0
        %1492 = vmatpush1.bf16.msra.mxu0 %v1451
        %1493 = vmatprep.subr.bf16.mxu0 0
        %1494 = vmatpush1.bf16.msra.mxu0 %v1452
        %1495 = vmatprep.subr.bf16.mxu0 0
        %1496 = vmatpush1.bf16.msra.mxu0 %v1453
        %1497 = vmatprep.subr.bf16.mxu0 0
        %1498 = vmatpush1.bf16.msra.mxu0 %v1454
        %1499 = vmatprep.subr.bf16.mxu0 0
        %1500 = vmatpush1.bf16.msra.mxu0 %v1455
        %1501 = vmatprep.subr.bf16.mxu0 0
        %1502 = vmatpush1.bf16.msra.mxu0 %v1456
        %1503 = vmatprep.subr.bf16.mxu0 0
        %1504 = vmatpush1.bf16.msra.mxu0 %v1457
        %1505 = vmatprep.subr.bf16.mxu0 0
        %1506 = vmatpush1.bf16.msra.mxu0 %v1458
        %1507 = vmatprep.mubr.bf16.mxu0 %v1309
        %1508 = vmatmul.mubr.bf16.gmra.mrb[0].mxu0 %v1308
        %v1509 = vpop.f32.mrb[0].mxu0
        %v1510 = vadd.f32 %v1377, %v1509
        %v1511 = vpop.f32.mrb[0].mxu0
        %v1512 = vpop.f32.mrb[0].mxu0
        %v1513 = vadd.f32 %v1377, %v1512
        %v1514 = vpop.f32.mrb[0].mxu0
        %1515 = vmatprep.mubr.bf16.mxu0 %v1311
        %1516 = vmatmul.mubr.bf16.gmra.mrb[0].mxu0 %v1310
        %v1517 = vpop.f32.mrb[0].mxu0
        %v1518 = vadd.f32 %v1377, %v1517
        %v1519 = vpop.f32.mrb[0].mxu0
        %v1520 = vpop.f32.mrb[0].mxu0
        %v1521 = vadd.f32 %v1377, %v1520
        %v1522 = vpop.f32.mrb[0].mxu0
        %1523 = vmatprep.mubr.bf16.mxu0 %v1313
        %1524 = vmatmul.mubr.bf16.gmra.mrb[0].mxu0 %v1312
        %v1525 = vpop.f32.mrb[0].mxu0
        %v1526 = vadd.f32 %v1377, %v1525
        %v1527 = vpop.f32.mrb[0].mxu0
        %v1528 = vpop.f32.mrb[0].mxu0
        %v1529 = vadd.f32 %v1377, %v1528
        %v1530 = vpop.f32.mrb[0].mxu0
        %1531 = vmatprep.mubr.bf16.mxu0 %v1315
        %1532 = vmatmul.mubr.bf16.gmra.mrb[0].mxu0 %v1314
        %v1533 = vpop.f32.mrb[0].mxu0
        %v1534 = vadd.f32 %v1377, %v1533
        %v1535 = vpop.f32.mrb[0].mxu0
        %v1536 = vpop.f32.mrb[0].mxu0
        %v1537 = vadd.f32 %v1377, %v1536
        %v1538 = vpop.f32.mrb[0].mxu0
        %1539 = vmatprep.mubr.bf16.mxu0 %v1317
        %1540 = vmatmul.mubr.bf16.gmra.mrb[0].mxu0 %v1316
        %v1541 = vpop.f32.mrb[0].mxu0
        %v1542 = vadd.f32 %v1377, %v1541
        %v1543 = vpop.f32.mrb[0].mxu0
        %v1544 = vpop.f32.mrb[0].mxu0
        %v1545 = vadd.f32 %v1377, %v1544
        %v1546 = vpop.f32.mrb[0].mxu0
        %1547 = vmatprep.mubr.bf16.mxu0 %v1319
        %1548 = vmatmul.mubr.bf16.gmra.mrb[0].mxu0 %v1318
        %v1549 = vpop.f32.mrb[0].mxu0
        %v1550 = vadd.f32 %v1377, %v1549
        %v1551 = vpop.f32.mrb[0].mxu0
        %v1552 = vpop.f32.mrb[0].mxu0
        %v1553 = vadd.f32 %v1377, %v1552
        %v1554 = vpop.f32.mrb[0].mxu0
        %1555 = vmatprep.mubr.bf16.mxu0 %v1321
        %1556 = vmatmul.mubr.bf16.gmra.mrb[0].mxu0 %v1320
        %v1557 = vpop.f32.mrb[0].mxu0
        %v1558 = vadd.f32 %v1377, %v1557
        %v1559 = vpop.f32.mrb[0].mxu0
        %v1560 = vpop.f32.mrb[0].mxu0
        %v1561 = vadd.f32 %v1377, %v1560
        %v1562 = vpop.f32.mrb[0].mxu0
        %1563 = vmatprep.mubr.bf16.mxu0 %v1323
        %1564 = vmatmul.mubr.bf16.gmra.mrb[0].mxu0 %v1322
        %v1565 = vpop.f32.mrb[0].mxu0
        %v1566 = vadd.f32 %v1377, %v1565
        %v1567 = vpop.f32.mrb[0].mxu0
        %v1568 = vpop.f32.mrb[0].mxu0
        %v1569 = vadd.f32 %v1377, %v1568
        %v1570 = vpop.f32.mrb[0].mxu0
        %1571 = vmatprep.mubr.bf16.mxu0 %v1325
        %1572 = vmatmul.mubr.bf16.gmra.mrb[0].mxu0 %v1324
        %v1573 = vpop.f32.mrb[0].mxu0
        %v1574 = vadd.f32 %v1377, %v1573
        %v1575 = vpop.f32.mrb[0].mxu0
        %v1576 = vpop.f32.mrb[0].mxu0
        %v1577 = vadd.f32 %v1377, %v1576
        %v1578 = vpop.f32.mrb[0].mxu0
        %1579 = vmatprep.mubr.bf16.mxu0 %v1327
        %1580 = vmatmul.mubr.bf16.gmra.mrb[0].mxu0 %v1326
        %v1581 = vpop.f32.mrb[0].mxu0
        %v1582 = vadd.f32 %v1377, %v1581
        %v1583 = vpop.f32.mrb[0].mxu0
        %v1584 = vpop.f32.mrb[0].mxu0
        %v1585 = vadd.f32 %v1377, %v1584
        %v1586 = vpop.f32.mrb[0].mxu0
        %1587 = vmatprep.mubr.bf16.mxu0 %v1329
        %1588 = vmatmul.mubr.bf16.gmra.mrb[0].mxu0 %v1328
        %v1589 = vpop.f32.mrb[0].mxu0
        %v1590 = vadd.f32 %v1377, %v1589
        %v1591 = vpop.f32.mrb[0].mxu0
        %v1592 = vpop.f32.mrb[0].mxu0
        %v1593 = vadd.f32 %v1377, %v1592
        %v1594 = vpop.f32.mrb[0].mxu0
        %1595 = vmatprep.mubr.bf16.mxu0 %v1331
        %1596 = vmatmul.mubr.bf16.gmra.mrb[0].mxu0 %v1330
        %v1597 = vpop.f32.mrb[0].mxu0
        %v1598 = vadd.f32 %v1377, %v1597
        %v1599 = vpop.f32.mrb[0].mxu0
        %v1600 = vpop.f32.mrb[0].mxu0
        %v1601 = vadd.f32 %v1377, %v1600
        %v1602 = vpop.f32.mrb[0].mxu0
        %1603 = vmatprep.mubr.bf16.mxu0 %v1333
        %1604 = vmatmul.mubr.bf16.gmra.mrb[0].mxu0 %v1332
        %v1605 = vpop.f32.mrb[0].mxu0
        %v1606 = vadd.f32 %v1377, %v1605
        %v1607 = vpop.f32.mrb[0].mxu0
        %v1608 = vpop.f32.mrb[0].mxu0
        %v1609 = vadd.f32 %v1377, %v1608
        %v1610 = vpop.f32.mrb[0].mxu0
        %1611 = vmatprep.mubr.bf16.mxu0 %v1335
        %1612 = vmatmul.mubr.bf16.gmra.mrb[0].mxu0 %v1334
        %v1613 = vpop.f32.mrb[0].mxu0
        %v1614 = vadd.f32 %v1377, %v1613
        %v1615 = vpop.f32.mrb[0].mxu0
        %v1616 = vpop.f32.mrb[0].mxu0
        %v1617 = vadd.f32 %v1377, %v1616
        %v1618 = vpop.f32.mrb[0].mxu0
        %1619 = vmatprep.mubr.bf16.mxu0 %v1337
        %1620 = vmatmul.mubr.bf16.gmra.mrb[0].mxu0 %v1336
        %v1621 = vpop.f32.mrb[0].mxu0
        %v1622 = vadd.f32 %v1377, %v1621
        %v1623 = vpop.f32.mrb[0].mxu0
        %v1624 = vpop.f32.mrb[0].mxu0
        %v1625 = vadd.f32 %v1377, %v1624
        %v1626 = vpop.f32.mrb[0].mxu0
        %1627 = vmatprep.mubr.bf16.mxu0 %v1339
        %1628 = vmatmul.mubr.bf16.gmra.mrb[0].mxu0 %v1338
        %v1629 = vpop.f32.mrb[0].mxu0
        %v1630 = vadd.f32 %v1377, %v1629
        %v1631 = vpop.f32.mrb[0].mxu0
        %v1632 = vpop.f32.mrb[0].mxu0
        %v1633 = vadd.f32 %v1377, %v1632
        %v1634 = vpop.f32.mrb[0].mxu0
        %1635 = vdwg.mxu0
        %v1636 = vpack.c.bf16 %v1513, %v1510
        %v1637 = vpack.c.bf16 %v1521, %v1518
        %v1638 = vpack.c.bf16 %v1529, %v1526
        %v1639 = vpack.c.bf16 %v1537, %v1534
        %v1640 = vpack.c.bf16 %v1545, %v1542
        %v1641 = vpack.c.bf16 %v1553, %v1550
        %v1642 = vpack.c.bf16 %v1561, %v1558
        %v1643 = vpack.c.bf16 %v1569, %v1566
        %v1644 = vpack.c.bf16 %v1577, %v1574
        %v1645 = vpack.c.bf16 %v1585, %v1582
        %v1646 = vpack.c.bf16 %v1593, %v1590
        %v1647 = vpack.c.bf16 %v1601, %v1598
        %v1648 = vpack.c.bf16 %v1609, %v1606
        %v1649 = vpack.c.bf16 %v1617, %v1614
        %v1650 = vpack.c.bf16 %v1625, %v1622
        %v1651 = vpack.c.bf16 %v1633, %v1630
        %v1652 = vld [vmem:[%s3] sm:$0x1]
        %v1653 = vunpack.c.l.bf16 %v1652
        %v1654 = vunpack.c.l.bf16 %v1636
        %v1655 = vunpack.c.h.bf16 %v1636
        %v1656 = vunpack.c.l.bf16 %v1637
        %v1657 = vunpack.c.h.bf16 %v1637
        %v1658 = vunpack.c.l.bf16 %v1638
        %v1659 = vunpack.c.h.bf16 %v1638
        %v1660 = vunpack.c.l.bf16 %v1639
        %v1661 = vunpack.c.h.bf16 %v1639
        %v1662 = vunpack.c.l.bf16 %v1640
        %v1663 = vunpack.c.h.bf16 %v1640
        %v1664 = vunpack.c.l.bf16 %v1641
        %v1665 = vunpack.c.h.bf16 %v1641
        %v1666 = vunpack.c.l.bf16 %v1642
        %v1667 = vunpack.c.h.bf16 %v1642
        %v1668 = vunpack.c.l.bf16 %v1643
        %v1669 = vunpack.c.h.bf16 %v1643
        %v1670 = vunpack.c.l.bf16 %v1644
        %v1671 = vunpack.c.h.bf16 %v1644
        %v1672 = vunpack.c.l.bf16 %v1645
        %v1673 = vunpack.c.h.bf16 %v1645
        %v1674 = vunpack.c.l.bf16 %v1646
        %v1675 = vunpack.c.h.bf16 %v1646
        %v1676 = vunpack.c.l.bf16 %v1647
        %v1677 = vunpack.c.h.bf16 %v1647
        %v1678 = vunpack.c.l.bf16 %v1648
        %v1679 = vunpack.c.h.bf16 %v1648
        %v1680 = vunpack.c.l.bf16 %v1649
        %v1681 = vunpack.c.h.bf16 %v1649
        %v1682 = vunpack.c.l.bf16 %v1650
        %v1683 = vunpack.c.h.bf16 %v1650
        %v1684 = vunpack.c.l.bf16 %v1651
        %v1685 = vunpack.c.h.bf16 %v1651
        %v1686 = vlaneseq
        %v1687 = vshrl.u32 %v1686, 7
        %v1688 = vsub.s32 0, %v1687
        %v1689 = vrot.slane %v1653, %v1688
        %v1690 = vmul.f32 %v1654, %v1689
        %v1691 = vmul.f32 %v1655, %v1689
        %v1692 = vmul.f32 %v1656, %v1689
        %v1693 = vmul.f32 %v1657, %v1689
        %v1694 = vmul.f32 %v1658, %v1689
        %v1695 = vmul.f32 %v1659, %v1689
        %v1696 = vmul.f32 %v1660, %v1689
        %v1697 = vmul.f32 %v1661, %v1689
        %v1698 = vmul.f32 %v1662, %v1689
        %v1699 = vmul.f32 %v1663, %v1689
        %v1700 = vmul.f32 %v1664, %v1689
        %v1701 = vmul.f32 %v1665, %v1689
        %v1702 = vmul.f32 %v1666, %v1689
        %v1703 = vmul.f32 %v1667, %v1689
        %v1704 = vmul.f32 %v1668, %v1689
        %v1705 = vmul.f32 %v1669, %v1689
        %v1706 = vmul.f32 %v1670, %v1689
        %v1707 = vmul.f32 %v1671, %v1689
        %v1708 = vmul.f32 %v1672, %v1689
        %v1709 = vmul.f32 %v1673, %v1689
        %v1710 = vmul.f32 %v1674, %v1689
        %v1711 = vmul.f32 %v1675, %v1689
        %v1712 = vmul.f32 %v1676, %v1689
        %v1713 = vmul.f32 %v1677, %v1689
        %v1714 = vmul.f32 %v1678, %v1689
        %v1715 = vmul.f32 %v1679, %v1689
        %v1716 = vmul.f32 %v1680, %v1689
        %v1717 = vmul.f32 %v1681, %v1689
        %v1718 = vmul.f32 %v1682, %v1689
        %v1719 = vmul.f32 %v1683, %v1689
        %v1720 = vmul.f32 %v1684, %v1689
        %v1721 = vmul.f32 %v1685, %v1689
        %1722 = vadd.xlane.f32.xlu0 %v1690
        %v1723 = vpop.xlane.xlu0 %1722
        %1724 = vadd.xlane.f32.xlu0 %v1691
        %v1725 = vpop.xlane.xlu0 %1724
        %1726 = vadd.xlane.f32.xlu0 %v1692
        %v1727 = vpop.xlane.xlu0 %1726
        %1728 = vadd.xlane.f32.xlu0 %v1693
        %v1729 = vpop.xlane.xlu0 %1728
        %1730 = vadd.xlane.f32.xlu0 %v1694
        %v1731 = vpop.xlane.xlu0 %1730
        %1732 = vadd.xlane.f32.xlu0 %v1695
        %v1733 = vpop.xlane.xlu0 %1732
        %1734 = vadd.xlane.f32.xlu0 %v1696
        %v1735 = vpop.xlane.xlu0 %1734
        %1736 = vadd.xlane.f32.xlu0 %v1697
        %v1737 = vpop.xlane.xlu0 %1736
        %1738 = vadd.xlane.f32.xlu0 %v1698
        %v1739 = vpop.xlane.xlu0 %1738
        %1740 = vadd.xlane.f32.xlu0 %v1699
        %v1741 = vpop.xlane.xlu0 %1740
        %1742 = vadd.xlane.f32.xlu0 %v1700
        %v1743 = vpop.xlane.xlu0 %1742
        %1744 = vadd.xlane.f32.xlu0 %v1701
        %v1745 = vpop.xlane.xlu0 %1744
        %1746 = vadd.xlane.f32.xlu0 %v1702
        %v1747 = vpop.xlane.xlu0 %1746
        %1748 = vadd.xlane.f32.xlu0 %v1703
        %v1749 = vpop.xlane.xlu0 %1748
        %1750 = vadd.xlane.f32.xlu0 %v1704
        %v1751 = vpop.xlane.xlu0 %1750
        %1752 = vadd.xlane.f32.xlu0 %v1705
        %v1753 = vpop.xlane.xlu0 %1752
        %1754 = vadd.xlane.f32.xlu0 %v1706
        %v1755 = vpop.xlane.xlu0 %1754
        %1756 = vadd.xlane.f32.xlu0 %v1707
        %v1757 = vpop.xlane.xlu0 %1756
        %1758 = vadd.xlane.f32.xlu0 %v1708
        %v1759 = vpop.xlane.xlu0 %1758
        %1760 = vadd.xlane.f32.xlu0 %v1709
        %v1761 = vpop.xlane.xlu0 %1760
        %1762 = vadd.xlane.f32.xlu0 %v1710
        %v1763 = vpop.xlane.xlu0 %1762
        %1764 = vadd.xlane.f32.xlu0 %v1711
        %v1765 = vpop.xlane.xlu0 %1764
        %1766 = vadd.xlane.f32.xlu0 %v1712
        %v1767 = vpop.xlane.xlu0 %1766
        %1768 = vadd.xlane.f32.xlu0 %v1713
        %v1769 = vpop.xlane.xlu0 %1768
        %1770 = vadd.xlane.f32.xlu0 %v1714
        %v1771 = vpop.xlane.xlu0 %1770
        %1772 = vadd.xlane.f32.xlu0 %v1715
        %v1773 = vpop.xlane.xlu0 %1772
        %1774 = vadd.xlane.f32.xlu0 %v1716
        %v1775 = vpop.xlane.xlu0 %1774
        %1776 = vadd.xlane.f32.xlu0 %v1717
        %v1777 = vpop.xlane.xlu0 %1776
        %1778 = vadd.xlane.f32.xlu0 %v1718
        %v1779 = vpop.xlane.xlu0 %1778
        %1780 = vadd.xlane.f32.xlu0 %v1719
        %v1781 = vpop.xlane.xlu0 %1780
        %1782 = vadd.xlane.f32.xlu0 %v1720
        %v1783 = vpop.xlane.xlu0 %1782
        %1784 = vadd.xlane.f32.xlu0 %v1721
        %v1785 = vpop.xlane.xlu0 %1784
        %v1786 = vld [vmem:[#allocation2] sm:$0x1]
        %v1788 = vlaneseq
        %v1789 = vshrl.u32 %v1788, 7
        %v1790 = vsub.s32 0, %v1789
        %v1791 = vrot.slane %v1786, %v1790
        %v1793 = vadd.f32 %v1723, %v1791
        %v1794 = vadd.f32 %v1725, %v1791
        %v1795 = vadd.f32 %v1727, %v1791
        %v1796 = vadd.f32 %v1729, %v1791
        %v1797 = vadd.f32 %v1731, %v1791
        %v1798 = vadd.f32 %v1733, %v1791
        %v1799 = vadd.f32 %v1735, %v1791
        %v1800 = vadd.f32 %v1737, %v1791
        %v1801 = vadd.f32 %v1739, %v1791
        %v1802 = vadd.f32 %v1741, %v1791
        %v1803 = vadd.f32 %v1743, %v1791
        %v1804 = vadd.f32 %v1745, %v1791
        %v1805 = vadd.f32 %v1747, %v1791
        %v1806 = vadd.f32 %v1749, %v1791
        %v1807 = vadd.f32 %v1751, %v1791
        %v1808 = vadd.f32 %v1753, %v1791
        %v1809 = vadd.f32 %v1755, %v1791
        %v1810 = vadd.f32 %v1757, %v1791
        %v1811 = vadd.f32 %v1759, %v1791
        %v1812 = vadd.f32 %v1761, %v1791
        %v1813 = vadd.f32 %v1763, %v1791
        %v1814 = vadd.f32 %v1765, %v1791
        %v1815 = vadd.f32 %v1767, %v1791
        %v1816 = vadd.f32 %v1769, %v1791
        %v1817 = vadd.f32 %v1771, %v1791
        %v1818 = vadd.f32 %v1773, %v1791
        %v1819 = vadd.f32 %v1775, %v1791
        %v1820 = vadd.f32 %v1777, %v1791
        %v1821 = vadd.f32 %v1779, %v1791
        %v1822 = vadd.f32 %v1781, %v1791
        %v1823 = vadd.f32 %v1783, %v1791
        %v1824 = vadd.f32 %v1785, %v1791
        %vm1825 = vcmask 7168
        %1826 = vst.msk [vmem:[%s331] sm:$0xff] %vm1825, %v1793
        %1827 = vst.msk [vmem:[%s331 + $0x8] sm:$0xff] %vm1825, %v1794
        %1828 = vst.msk [vmem:[%s331 + $0x10] sm:$0xff] %vm1825, %v1795
        %1829 = vst.msk [vmem:[%s331 + $0x18] sm:$0xff] %vm1825, %v1796
        %1830 = vst.msk [vmem:[%s331 + $0x20] sm:$0xff] %vm1825, %v1797
        %1831 = vst.msk [vmem:[%s331 + $0x28] sm:$0xff] %vm1825, %v1798
        %1832 = vst.msk [vmem:[%s331 + $0x30] sm:$0xff] %vm1825, %v1799
        %1833 = vst.msk [vmem:[%s331 + $0x38] sm:$0xff] %vm1825, %v1800
        %1834 = vst.msk [vmem:[%s331 + $0x40] sm:$0xff] %vm1825, %v1801
        %1835 = vst.msk [vmem:[%s331 + $0x48] sm:$0xff] %vm1825, %v1802
        %1836 = vst.msk [vmem:[%s331 + $0x50] sm:$0xff] %vm1825, %v1803
        %1837 = vst.msk [vmem:[%s331 + $0x58] sm:$0xff] %vm1825, %v1804
        %1838 = vst.msk [vmem:[%s331 + $0x60] sm:$0xff] %vm1825, %v1805
        %1839 = vst.msk [vmem:[%s331 + $0x68] sm:$0xff] %vm1825, %v1806
        %1840 = vst.msk [vmem:[%s331 + $0x70] sm:$0xff] %vm1825, %v1807
        %1841 = vst.msk [vmem:[%s331 + $0x78] sm:$0xff] %vm1825, %v1808
        %1842 = vst.msk [vmem:[%s331 + $0x80] sm:$0xff] %vm1825, %v1809
        %1843 = vst.msk [vmem:[%s331 + $0x88] sm:$0xff] %vm1825, %v1810
        %1844 = vst.msk [vmem:[%s331 + $0x90] sm:$0xff] %vm1825, %v1811
        %1845 = vst.msk [vmem:[%s331 + $0x98] sm:$0xff] %vm1825, %v1812
        %1846 = vst.msk [vmem:[%s331 + $0xa0] sm:$0xff] %vm1825, %v1813
        %1847 = vst.msk [vmem:[%s331 + $0xa8] sm:$0xff] %vm1825, %v1814
        %1848 = vst.msk [vmem:[%s331 + $0xb0] sm:$0xff] %vm1825, %v1815
        %1849 = vst.msk [vmem:[%s331 + $0xb8] sm:$0xff] %vm1825, %v1816
        %1850 = vst.msk [vmem:[%s331 + $0xc0] sm:$0xff] %vm1825, %v1817
        %1851 = vst.msk [vmem:[%s331 + $0xc8] sm:$0xff] %vm1825, %v1818
        %1852 = vst.msk [vmem:[%s331 + $0xd0] sm:$0xff] %vm1825, %v1819
        %1853 = vst.msk [vmem:[%s331 + $0xd8] sm:$0xff] %vm1825, %v1820
        %1854 = vst.msk [vmem:[%s331 + $0xe0] sm:$0xff] %vm1825, %v1821
        %1855 = vst.msk [vmem:[%s331 + $0xe8] sm:$0xff] %vm1825, %v1822
        %1856 = vst.msk [vmem:[%s331 + $0xf0] sm:$0xff] %vm1825, %v1823
        %1857 = vst.msk [vmem:[%s331 + $0xf8] sm:$0xff] %vm1825, %v1824
        %s1858 = smul.u32 32, %s24
        %p1859 = scmp.lt.s32.totalorder %s1858, 63
        %s1860 = scalar_select %p1859, %s1858, 63
        %s1861 = smul.addr %s1860, 8
        %s1862 = scalar_lea.vmem %s7, %s1861
        // Predicated region
        $region61: #{mlp_forward.1} parent=47 // pred_check
          %p1863 = pneg %p194
        $region62: #{mlp_forward.1} parent=47 // pred_check_branch
          %1865 = sbr.rel (%p1863) target = $region64
        $region63: #{mlp_forward.1} parent=47 // pred_region
          %s1866 = smul.u32 32, %s24
        $region64: #{mlp_forward.1} parent=47 // pred_fallthru
          _
      $region48: #{mlp_forward.1} parent=5 // pred_fallthru
        _
      %p1867 = scmp.le.s32.totalorder 2, %s19
      // Predicated region
      $region65: #{mlp_forward.1} parent=5 // pred_check
        %p1868 = pneg %p1867
      $region66: #{mlp_forward.1} parent=5 // pred_check_branch
        %1870 = sbr.rel (%p1868) target = $region68
      $region67: #{mlp_forward.1} parent=5 // pred_region
        %s1871 = ssub.s32 %s19, 2
        // Predicated region
        $region69: #{mlp_forward.1} parent=67 // pred_check
          %p1872 = pneg %p200
        $region70: #{mlp_forward.1} parent=67 // pred_check_branch
          %1874 = sbr.rel (%p1872) target = $region72
        $region71: #{mlp_forward.1} parent=67 // pred_region
          %s1875 = smul.u32 32, %s25
          %p1876 = scmp.lt.s32.totalorder %s1875, 63
          %s1877 = scalar_select %p1876, %s1875, 63
          %s1878 = smul.addr %s1877, 8
          %s1879 = scalar_lea.vmem %s7, %s1878
        $region72: #{mlp_forward.1} parent=67 // pred_fallthru
          _
      $region68: #{mlp_forward.1} parent=5 // pred_fallthru
        _
    $region6: #{mlp_forward.1} parent=1 // loop_footer
      %s23 = sadd.s32 1, %s19
    $region7: #{mlp_forward.1} parent=1 // loop_footer_branch
      %18 = sbr.rel target = $region3
    $region8: #{mlp_forward.1} parent=1 // loop_exit
      _
    %1880 = vsyncpa [#allocation4], 1
    %s1881 = scalar_lea.sflag [#allocation4], 1
    %1882 = vsyncpa %s1881, 1
    %1883 = vsyncpa [#allocation6], 1

</llo_original>
